<compile_context>
chip_gen: v7x
topology: tpu7x:2x2x1
jax: 0.10.0
libtpu: 0.0.40
codegen_flags: <defaults>
</compile_context>

<pallas_src>
import functools

import numpy as np
import jax
import jax.numpy as jnp
from jax.experimental import pallas as pl
from jax.experimental.pallas import tpu as pltpu

DELTA = 1e-6
LOG100 = float(np.log(100.0))


def _softplus(x):
    # numerically stable softplus, matches torch.nn.Softplus forward
    return jnp.maximum(x, 0.0) + jnp.log(1.0 + jnp.exp(-jnp.abs(x)))


def sigmoid_flow_kernel(x_ref, dsp_ref, o_ref, *, num_ds_dim, mollify, delta,
                        use_approx_recip):
    nd = num_ds_dim
    x = x_ref[...].astype(jnp.float32)                  # (bb, bd)

    # --- pass 1: running max of the nd mixture-weight logits (stable softmax) ---
    m = dsp_ref[2 * nd].astype(jnp.float32)
    for k in range(1, nd):
        m = jnp.maximum(m, dsp_ref[2 * nd + k].astype(jnp.float32))

    # --- pass 2: single fused mixture loop with running num/den accumulators ---
    num = jnp.zeros_like(x)
    den = jnp.zeros_like(x)
    for k in range(nd):
        a = _softplus(dsp_ref[k].astype(jnp.float32)) + delta   # act_a
        b = dsp_ref[nd + k].astype(jnp.float32)                 # act_b (identity)
        if mollify:  # trace-time constant; skip the blend entirely when 0.0
            a = a * (1.0 - mollify) + 1.0 * mollify
            b = b * (1.0 - mollify)
        e = jnp.exp(dsp_ref[2 * nd + k].astype(jnp.float32) - m)
        z = a * x + b
        sigm = 0.5 * (jnp.tanh(0.5 * z) + 1.0)                  # == sigmoid(z), 1 EUP op
        num = num + e * sigm
        den = den + e

    if use_approx_recip:
        # v7x EUP trim; slightly perturbs results (amplified by the logit near
        # saturation), so it is opt-in.
        x_pre = num * pl.reciprocal(den, approx=True)
    else:
        x_pre = num / den

    # --- clip + logit; log(100*x)-log(100) == log(x), so fold the constants ---
    xpc = x_pre * (1.0 - delta) + delta * 0.5
    out = jnp.log(xpc) - jnp.log(1.0 - xpc)
    o_ref[...] = out.astype(o_ref.dtype)


def _pick_block(total, target, quantum):
    """Largest divisor of `total` that is a multiple of `quantum` and <= target.

    Falls back to the full dimension (always legal per the (8, 128) rule)."""
    best = None
    for cand in range(quantum, min(total, target) + 1, quantum):
        if total % cand == 0:
            best = cand
    return best if best is not None else total


def sigmoid_flow(x, dsparams_t, *, num_ds_dim=4, mollify=0.0, delta=DELTA,
                 block_b=None, block_d=None, target_elems=64 * 1024,
                 use_approx_recip=False):
    """x: (B, D); dsparams_t: (3*num_ds_dim, B, D)  (params-first layout)."""
    B, D = x.shape
    nd = num_ds_dim
    assert dsparams_t.shape == (3 * nd, B, D), dsparams_t.shape

    # --- tile selection: big lane-dense tiles, VMEM-safe on all generations ---
    if block_d is None:
        block_d = _pick_block(D, 512, 128)
    if block_b is None:
        block_b = _pick_block(B, max(8, target_elems // block_d), 8)
    assert B % block_b == 0 and (block_b % 8 == 0 or block_b == B)
    assert D % block_d == 0 and (block_d % 128 == 0 or block_d == D)

    # Explicit VMEM budget: double-buffered I/O tiles + live temporaries + slack.
    tile_bytes = block_b * block_d * 4
    io_bytes = 2 * (3 * nd + 2) * tile_bytes       # 2 bufs x (dsp slices + x + out)
    scratch_bytes = 10 * tile_bytes                # live f32 temporaries headroom
    vmem_limit = max(32 * 1024 * 1024, int(1.5 * (io_bytes + scratch_bytes)))

    kernel = functools.partial(
        sigmoid_flow_kernel, num_ds_dim=nd, mollify=float(mollify),
        delta=float(delta), use_approx_recip=use_approx_recip)

    return pl.pallas_call(
        kernel,
        out_shape=jax.ShapeDtypeStruct((B, D), x.dtype),
        grid_spec=pltpu.PrefetchScalarGridSpec(
            num_scalar_prefetch=0,
            grid=(B // block_b, D // block_d),
            in_specs=[
                pl.BlockSpec((block_b, block_d), lambda i, j: (i, j)),
                pl.BlockSpec((3 * nd, block_b, block_d), lambda i, j: (0, i, j)),
            ],
            out_specs=pl.BlockSpec((block_b, block_d), lambda i, j: (i, j)),
        ),
        compiler_params=pltpu.CompilerParams(
            dimension_semantics=("parallel", "parallel"),
            vmem_limit_bytes=vmem_limit),
    )(x, dsparams_t)


def sigmoid_flow_from_torch_layout(x, dsparams, **kw):
    """Convenience path for the original (B, D, 3*ndim) layout.

    NOTE: the transpose is a full extra HBM pass over the 12x-sized parameter
    tensor; performance-critical callers should produce the (3*ndim, B, D)
    layout upstream and call sigmoid_flow() directly.
    """
    return sigmoid_flow(x, jnp.transpose(dsparams, (2, 0, 1)), **kw)


def sigmoid_flow_reference(x, dsparams, *, num_ds_dim=4, mollify=0.0, delta=DELTA):
    """Pure-JAX reference mirroring the PyTorch forward (original layout)."""
    nd = num_ds_dim
    a_ = _softplus(dsparams[:, :, 0 * nd:1 * nd]) + delta
    b_ = dsparams[:, :, 1 * nd:2 * nd]
    wl = dsparams[:, :, 2 * nd:3 * nd]
    w = jax.nn.softmax(wl, axis=2)
    a = a_ * (1 - mollify) + 1.0 * mollify
    b = b_ * (1 - mollify) + 0.0 * mollify
    pre_sigm = a * x[:, :, None] + b
    sigm = 1.0 / (1.0 + jnp.exp(-pre_sigm))
    x_pre = jnp.sum(w * sigm, axis=2)
    xpc = x_pre * (1 - delta) + delta * 0.5
    return (jnp.log(xpc * 100.0) - LOG100) - (jnp.log((1.0 - xpc) * 100.0) - LOG100)


if __name__ == "__main__":
    num_ds_dim = 4                       # SigmoidFlow(num_ds_dim=4) -> num_params = 12
    B, D = 64, 256

    key = jax.random.PRNGKey(0)
    kx, kp = jax.random.split(key)
    x = jax.random.normal(kx, (B, D), dtype=jnp.float32)
    # Produce parameters directly in the kernel-friendly (3*nd, B, D) layout
    # (what an upstream producer should emit).
    dsp_t = jax.random.normal(kp, (3 * num_ds_dim, B, D), dtype=jnp.float32)
    dsparams = jnp.transpose(dsp_t, (1, 2, 0))          # original layout, ref only

    ref = sigmoid_flow_reference(x, dsparams, num_ds_dim=num_ds_dim)

    # 1) default (large-tile) configuration
    out = jax.block_until_ready(sigmoid_flow(x, dsp_t, num_ds_dim=num_ds_dim))
    np.testing.assert_allclose(np.asarray(out), np.asarray(ref), rtol=5e-4, atol=5e-4)

    # 2) explicit smaller blocks -> multi-step (4, 2) grid, exercises tiling
    out2 = jax.block_until_ready(
        sigmoid_flow(x, dsp_t, num_ds_dim=num_ds_dim, block_b=16, block_d=128))
    np.testing.assert_allclose(np.asarray(out2), np.asarray(ref), rtol=5e-4, atol=5e-4)

    # 3) bf16 parameter storage (halves the dominant HBM traffic) — smoke run
    out_bf16 = jax.block_until_ready(
        sigmoid_flow(x, dsp_t.astype(jnp.bfloat16), num_ds_dim=num_ds_dim))
    assert bool(jnp.all(jnp.isfinite(out_bf16)))

    print("KERNEL_OK")
</pallas_src>

<mosaic_0001>
module attributes {stable_mosaic.version = 11 : i64} {
  func.func @sigmoid_flow_kernel(%arg0: i32, %arg1: i32, %arg2: memref<64x256xf32, #tpu.memory_space<vmem>>, %arg3: memref<12x64x256xf32, #tpu.memory_space<vmem>>, %arg4: memref<64x256xf32, #tpu.memory_space<vmem>>) attributes {dimension_semantics = [#tpu.dimension_semantics<parallel>, #tpu.dimension_semantics<parallel>], iteration_bounds = array<i64: 1, 1>, scalar_prefetch = 0 : i64, scratch_operands = 0 : i64, tpu.core_type = #tpu.core_type<tc>, window_params = [{transform_indices = @transform_0, window_bounds = array<i64: 64, 256>}, {transform_indices = @transform_1, window_bounds = array<i64: 12, 64, 256>}, {transform_indices = @transform_2, window_bounds = array<i64: 64, 256>}]} {
    %c0 = arith.constant 0 : index
    %c0_0 = arith.constant 0 : index
    %0 = vector.load %arg2[%c0, %c0_0] : memref<64x256xf32, #tpu.memory_space<vmem>>, vector<64x256xf32>
    %c8 = arith.constant 8 : index
    %c0_1 = arith.constant 0 : index
    %c0_2 = arith.constant 0 : index
    %1 = vector.load %arg3[%c8, %c0_1, %c0_2] : memref<12x64x256xf32, #tpu.memory_space<vmem>>, vector<1x64x256xf32>
    %2 = vector.shape_cast %1 : vector<1x64x256xf32> to vector<64x256xf32>
    %c9 = arith.constant 9 : index
    %c0_3 = arith.constant 0 : index
    %c0_4 = arith.constant 0 : index
    %3 = vector.load %arg3[%c9, %c0_3, %c0_4] : memref<12x64x256xf32, #tpu.memory_space<vmem>>, vector<1x64x256xf32>
    %4 = vector.shape_cast %3 : vector<1x64x256xf32> to vector<64x256xf32>
    %5 = arith.maximumf %2, %4 : vector<64x256xf32>
    %c10 = arith.constant 10 : index
    %c0_5 = arith.constant 0 : index
    %c0_6 = arith.constant 0 : index
    %6 = vector.load %arg3[%c10, %c0_5, %c0_6] : memref<12x64x256xf32, #tpu.memory_space<vmem>>, vector<1x64x256xf32>
    %7 = vector.shape_cast %6 : vector<1x64x256xf32> to vector<64x256xf32>
    %8 = arith.maximumf %5, %7 : vector<64x256xf32>
    %c11 = arith.constant 11 : index
    %c0_7 = arith.constant 0 : index
    %c0_8 = arith.constant 0 : index
    %9 = vector.load %arg3[%c11, %c0_7, %c0_8] : memref<12x64x256xf32, #tpu.memory_space<vmem>>, vector<1x64x256xf32>
    %10 = vector.shape_cast %9 : vector<1x64x256xf32> to vector<64x256xf32>
    %11 = arith.maximumf %8, %10 : vector<64x256xf32>
    %cst = arith.constant 0.000000e+00 : f32
    %12 = vector.broadcast %cst : f32 to vector<64x256xf32>
    %cst_9 = arith.constant 0.000000e+00 : f32
    %13 = vector.broadcast %cst_9 : f32 to vector<64x256xf32>
    %c0_10 = arith.constant 0 : index
    %c0_11 = arith.constant 0 : index
    %c0_12 = arith.constant 0 : index
    %14 = vector.load %arg3[%c0_10, %c0_11, %c0_12] : memref<12x64x256xf32, #tpu.memory_space<vmem>>, vector<1x64x256xf32>
    %15 = vector.shape_cast %14 : vector<1x64x256xf32> to vector<64x256xf32>
    %cst_13 = arith.constant 0.000000e+00 : f32
    %16 = vector.broadcast %cst_13 : f32 to vector<64x256xf32>
    %17 = arith.maximumf %15, %16 : vector<64x256xf32>
    %18 = math.absf %15 : vector<64x256xf32>
    %cst_14 = arith.constant 0.000000e+00 : f32
    %19 = vector.broadcast %cst_14 : f32 to vector<64x256xf32>
    %20 = arith.subf %19, %18 : vector<64x256xf32>
    %21 = math.exp %20 : vector<64x256xf32>
    %cst_15 = arith.constant 1.000000e+00 : f32
    %22 = vector.broadcast %cst_15 : f32 to vector<64x256xf32>
    %23 = arith.addf %22, %21 : vector<64x256xf32>
    %24 = math.log %23 : vector<64x256xf32>
    %25 = arith.addf %17, %24 : vector<64x256xf32>
    %cst_16 = arith.constant 9.99999997E-7 : f32
    %26 = vector.broadcast %cst_16 : f32 to vector<64x256xf32>
    %27 = arith.addf %25, %26 : vector<64x256xf32>
    %c4 = arith.constant 4 : index
    %c0_17 = arith.constant 0 : index
    %c0_18 = arith.constant 0 : index
    %28 = vector.load %arg3[%c4, %c0_17, %c0_18] : memref<12x64x256xf32, #tpu.memory_space<vmem>>, vector<1x64x256xf32>
    %29 = vector.shape_cast %28 : vector<1x64x256xf32> to vector<64x256xf32>
    %c8_19 = arith.constant 8 : index
    %c0_20 = arith.constant 0 : index
    %c0_21 = arith.constant 0 : index
    %30 = vector.load %arg3[%c8_19, %c0_20, %c0_21] : memref<12x64x256xf32, #tpu.memory_space<vmem>>, vector<1x64x256xf32>
    %31 = vector.shape_cast %30 : vector<1x64x256xf32> to vector<64x256xf32>
    %32 = arith.subf %31, %11 : vector<64x256xf32>
    %33 = math.exp %32 : vector<64x256xf32>
    %34 = arith.mulf %27, %0 : vector<64x256xf32>
    %35 = arith.addf %34, %29 : vector<64x256xf32>
    %cst_22 = arith.constant 5.000000e-01 : f32
    %36 = vector.broadcast %cst_22 : f32 to vector<64x256xf32>
    %37 = arith.mulf %36, %35 : vector<64x256xf32>
    %38 = math.tanh %37 : vector<64x256xf32>
    %cst_23 = arith.constant 1.000000e+00 : f32
    %39 = vector.broadcast %cst_23 : f32 to vector<64x256xf32>
    %40 = arith.addf %38, %39 : vector<64x256xf32>
    %cst_24 = arith.constant 5.000000e-01 : f32
    %41 = vector.broadcast %cst_24 : f32 to vector<64x256xf32>
    %42 = arith.mulf %41, %40 : vector<64x256xf32>
    %43 = arith.mulf %33, %42 : vector<64x256xf32>
    %44 = arith.addf %12, %43 : vector<64x256xf32>
    %45 = arith.addf %13, %33 : vector<64x256xf32>
    %c1 = arith.constant 1 : index
    %c0_25 = arith.constant 0 : index
    %c0_26 = arith.constant 0 : index
    %46 = vector.load %arg3[%c1, %c0_25, %c0_26] : memref<12x64x256xf32, #tpu.memory_space<vmem>>, vector<1x64x256xf32>
    %47 = vector.shape_cast %46 : vector<1x64x256xf32> to vector<64x256xf32>
    %cst_27 = arith.constant 0.000000e+00 : f32
    %48 = vector.broadcast %cst_27 : f32 to vector<64x256xf32>
    %49 = arith.maximumf %47, %48 : vector<64x256xf32>
    %50 = math.absf %47 : vector<64x256xf32>
    %cst_28 = arith.constant 0.000000e+00 : f32
    %51 = vector.broadcast %cst_28 : f32 to vector<64x256xf32>
    %52 = arith.subf %51, %50 : vector<64x256xf32>
    %53 = math.exp %52 : vector<64x256xf32>
    %cst_29 = arith.constant 1.000000e+00 : f32
    %54 = vector.broadcast %cst_29 : f32 to vector<64x256xf32>
    %55 = arith.addf %54, %53 : vector<64x256xf32>
    %56 = math.log %55 : vector<64x256xf32>
    %57 = arith.addf %49, %56 : vector<64x256xf32>
    %cst_30 = arith.constant 9.99999997E-7 : f32
    %58 = vector.broadcast %cst_30 : f32 to vector<64x256xf32>
    %59 = arith.addf %57, %58 : vector<64x256xf32>
    %c5 = arith.constant 5 : index
    %c0_31 = arith.constant 0 : index
    %c0_32 = arith.constant 0 : index
    %60 = vector.load %arg3[%c5, %c0_31, %c0_32] : memref<12x64x256xf32, #tpu.memory_space<vmem>>, vector<1x64x256xf32>
    %61 = vector.shape_cast %60 : vector<1x64x256xf32> to vector<64x256xf32>
    %c9_33 = arith.constant 9 : index
    %c0_34 = arith.constant 0 : index
    %c0_35 = arith.constant 0 : index
    %62 = vector.load %arg3[%c9_33, %c0_34, %c0_35] : memref<12x64x256xf32, #tpu.memory_space<vmem>>, vector<1x64x256xf32>
    %63 = vector.shape_cast %62 : vector<1x64x256xf32> to vector<64x256xf32>
    %64 = arith.subf %63, %11 : vector<64x256xf32>
    %65 = math.exp %64 : vector<64x256xf32>
    %66 = arith.mulf %59, %0 : vector<64x256xf32>
    %67 = arith.addf %66, %61 : vector<64x256xf32>
    %cst_36 = arith.constant 5.000000e-01 : f32
    %68 = vector.broadcast %cst_36 : f32 to vector<64x256xf32>
    %69 = arith.mulf %68, %67 : vector<64x256xf32>
    %70 = math.tanh %69 : vector<64x256xf32>
    %cst_37 = arith.constant 1.000000e+00 : f32
    %71 = vector.broadcast %cst_37 : f32 to vector<64x256xf32>
    %72 = arith.addf %70, %71 : vector<64x256xf32>
    %cst_38 = arith.constant 5.000000e-01 : f32
    %73 = vector.broadcast %cst_38 : f32 to vector<64x256xf32>
    %74 = arith.mulf %73, %72 : vector<64x256xf32>
    %75 = arith.mulf %65, %74 : vector<64x256xf32>
    %76 = arith.addf %44, %75 : vector<64x256xf32>
    %77 = arith.addf %45, %65 : vector<64x256xf32>
    %c2 = arith.constant 2 : index
    %c0_39 = arith.constant 0 : index
    %c0_40 = arith.constant 0 : index
    %78 = vector.load %arg3[%c2, %c0_39, %c0_40] : memref<12x64x256xf32, #tpu.memory_space<vmem>>, vector<1x64x256xf32>
    %79 = vector.shape_cast %78 : vector<1x64x256xf32> to vector<64x256xf32>
    %cst_41 = arith.constant 0.000000e+00 : f32
    %80 = vector.broadcast %cst_41 : f32 to vector<64x256xf32>
    %81 = arith.maximumf %79, %80 : vector<64x256xf32>
    %82 = math.absf %79 : vector<64x256xf32>
    %cst_42 = arith.constant 0.000000e+00 : f32
    %83 = vector.broadcast %cst_42 : f32 to vector<64x256xf32>
    %84 = arith.subf %83, %82 : vector<64x256xf32>
    %85 = math.exp %84 : vector<64x256xf32>
    %cst_43 = arith.constant 1.000000e+00 : f32
    %86 = vector.broadcast %cst_43 : f32 to vector<64x256xf32>
    %87 = arith.addf %86, %85 : vector<64x256xf32>
    %88 = math.log %87 : vector<64x256xf32>
    %89 = arith.addf %81, %88 : vector<64x256xf32>
    %cst_44 = arith.constant 9.99999997E-7 : f32
    %90 = vector.broadcast %cst_44 : f32 to vector<64x256xf32>
    %91 = arith.addf %89, %90 : vector<64x256xf32>
    %c6 = arith.constant 6 : index
    %c0_45 = arith.constant 0 : index
    %c0_46 = arith.constant 0 : index
    %92 = vector.load %arg3[%c6, %c0_45, %c0_46] : memref<12x64x256xf32, #tpu.memory_space<vmem>>, vector<1x64x256xf32>
    %93 = vector.shape_cast %92 : vector<1x64x256xf32> to vector<64x256xf32>
    %c10_47 = arith.constant 10 : index
    %c0_48 = arith.constant 0 : index
    %c0_49 = arith.constant 0 : index
    %94 = vector.load %arg3[%c10_47, %c0_48, %c0_49] : memref<12x64x256xf32, #tpu.memory_space<vmem>>, vector<1x64x256xf32>
    %95 = vector.shape_cast %94 : vector<1x64x256xf32> to vector<64x256xf32>
    %96 = arith.subf %95, %11 : vector<64x256xf32>
    %97 = math.exp %96 : vector<64x256xf32>
    %98 = arith.mulf %91, %0 : vector<64x256xf32>
    %99 = arith.addf %98, %93 : vector<64x256xf32>
    %cst_50 = arith.constant 5.000000e-01 : f32
    %100 = vector.broadcast %cst_50 : f32 to vector<64x256xf32>
    %101 = arith.mulf %100, %99 : vector<64x256xf32>
    %102 = math.tanh %101 : vector<64x256xf32>
    %cst_51 = arith.constant 1.000000e+00 : f32
    %103 = vector.broadcast %cst_51 : f32 to vector<64x256xf32>
    %104 = arith.addf %102, %103 : vector<64x256xf32>
    %cst_52 = arith.constant 5.000000e-01 : f32
    %105 = vector.broadcast %cst_52 : f32 to vector<64x256xf32>
    %106 = arith.mulf %105, %104 : vector<64x256xf32>
    %107 = arith.mulf %97, %106 : vector<64x256xf32>
    %108 = arith.addf %76, %107 : vector<64x256xf32>
    %109 = arith.addf %77, %97 : vector<64x256xf32>
    %c3 = arith.constant 3 : index
    %c0_53 = arith.constant 0 : index
    %c0_54 = arith.constant 0 : index
    %110 = vector.load %arg3[%c3, %c0_53, %c0_54] : memref<12x64x256xf32, #tpu.memory_space<vmem>>, vector<1x64x256xf32>
    %111 = vector.shape_cast %110 : vector<1x64x256xf32> to vector<64x256xf32>
    %cst_55 = arith.constant 0.000000e+00 : f32
    %112 = vector.broadcast %cst_55 : f32 to vector<64x256xf32>
    %113 = arith.maximumf %111, %112 : vector<64x256xf32>
    %114 = math.absf %111 : vector<64x256xf32>
    %cst_56 = arith.constant 0.000000e+00 : f32
    %115 = vector.broadcast %cst_56 : f32 to vector<64x256xf32>
    %116 = arith.subf %115, %114 : vector<64x256xf32>
    %117 = math.exp %116 : vector<64x256xf32>
    %cst_57 = arith.constant 1.000000e+00 : f32
    %118 = vector.broadcast %cst_57 : f32 to vector<64x256xf32>
    %119 = arith.addf %118, %117 : vector<64x256xf32>
    %120 = math.log %119 : vector<64x256xf32>
    %121 = arith.addf %113, %120 : vector<64x256xf32>
    %cst_58 = arith.constant 9.99999997E-7 : f32
    %122 = vector.broadcast %cst_58 : f32 to vector<64x256xf32>
    %123 = arith.addf %121, %122 : vector<64x256xf32>
    %c7 = arith.constant 7 : index
    %c0_59 = arith.constant 0 : index
    %c0_60 = arith.constant 0 : index
    %124 = vector.load %arg3[%c7, %c0_59, %c0_60] : memref<12x64x256xf32, #tpu.memory_space<vmem>>, vector<1x64x256xf32>
    %125 = vector.shape_cast %124 : vector<1x64x256xf32> to vector<64x256xf32>
    %c11_61 = arith.constant 11 : index
    %c0_62 = arith.constant 0 : index
    %c0_63 = arith.constant 0 : index
    %126 = vector.load %arg3[%c11_61, %c0_62, %c0_63] : memref<12x64x256xf32, #tpu.memory_space<vmem>>, vector<1x64x256xf32>
    %127 = vector.shape_cast %126 : vector<1x64x256xf32> to vector<64x256xf32>
    %128 = arith.subf %127, %11 : vector<64x256xf32>
    %129 = math.exp %128 : vector<64x256xf32>
    %130 = arith.mulf %123, %0 : vector<64x256xf32>
    %131 = arith.addf %130, %125 : vector<64x256xf32>
    %cst_64 = arith.constant 5.000000e-01 : f32
    %132 = vector.broadcast %cst_64 : f32 to vector<64x256xf32>
    %133 = arith.mulf %132, %131 : vector<64x256xf32>
    %134 = math.tanh %133 : vector<64x256xf32>
    %cst_65 = arith.constant 1.000000e+00 : f32
    %135 = vector.broadcast %cst_65 : f32 to vector<64x256xf32>
    %136 = arith.addf %134, %135 : vector<64x256xf32>
    %cst_66 = arith.constant 5.000000e-01 : f32
    %137 = vector.broadcast %cst_66 : f32 to vector<64x256xf32>
    %138 = arith.mulf %137, %136 : vector<64x256xf32>
    %139 = arith.mulf %129, %138 : vector<64x256xf32>
    %140 = arith.addf %108, %139 : vector<64x256xf32>
    %141 = arith.addf %109, %129 : vector<64x256xf32>
    %142 = arith.divf %140, %141 : vector<64x256xf32>
    %cst_67 = arith.constant 0.999998986 : f32
    %143 = vector.broadcast %cst_67 : f32 to vector<64x256xf32>
    %144 = arith.mulf %142, %143 : vector<64x256xf32>
    %cst_68 = arith.constant 5.000000e-07 : f32
    %145 = vector.broadcast %cst_68 : f32 to vector<64x256xf32>
    %146 = arith.addf %144, %145 : vector<64x256xf32>
    %147 = math.log %146 : vector<64x256xf32>
    %cst_69 = arith.constant 1.000000e+00 : f32
    %148 = vector.broadcast %cst_69 : f32 to vector<64x256xf32>
    %149 = arith.subf %148, %146 : vector<64x256xf32>
    %150 = math.log %149 : vector<64x256xf32>
    %151 = arith.subf %147, %150 : vector<64x256xf32>
    %c0_70 = arith.constant 0 : index
    %c0_71 = arith.constant 0 : index
    %152 = vector.load %arg4[%c0_70, %c0_71] : memref<64x256xf32, #tpu.memory_space<vmem>>, vector<64x256xf32>
    tpu.vector_store %arg4[%c0_70, %c0_71], %151 {strides = array<i32>} : memref<64x256xf32, #tpu.memory_space<vmem>>, vector<64x256xf32>,
    return
  }
  func.func @transform_0(%arg0: i32, %arg1: i32) -> (i32, i32) {
    %c0_i32 = arith.constant 0 : i32
    return %arg0, %arg1 : i32, i32
  }
  func.func @transform_1(%arg0: i32, %arg1: i32) -> (i32, i32, i32) {
    %c0_i32 = arith.constant 0 : i32
    %c0_i32_0 = arith.constant 0 : i32
    return %c0_i32, %arg0, %arg1 : i32, i32, i32
  }
  func.func @transform_2(%arg0: i32, %arg1: i32) -> (i32, i32) {
    %c0_i32 = arith.constant 0 : i32
    return %arg0, %arg1 : i32, i32
  }
}

</mosaic_0001>

<llo_original>
// kernel: tpu_custom_call.1
$region0: #{tpu_custom_call.1}
  #allocation0 [shape = 'u32[]', space=smem, size = 0x4, offset = 0x4, fixed_abs, tag = 'smem constant byte address 0x4 - core index']
  #allocation1 [shape = 'u32[144,128]{1,0:T(1,128)}', space=vmem, size = 0x12000, scoped, tag = 'internal scratch']
  %s0 = inlined_call_operand.hbm [shape: f32[64,256], index: 0, kind: input, shape index: {}]
  %s1 = inlined_call_operand.hbm [shape: f32[12,64,256], index: 1, kind: input, shape index: {}]
  %s2 = inlined_call_operand.hbm [shape: f32[64,256], index: 2, kind: output, shape index: {}]
  %s3 = sld [smem:[#allocation0]]
  $region26: #{tpu_custom_call.1} parent=0
    _
  %s5 = ssub.s32 1, %s3
  %s6 = scalar_select 0, %s5, %s3
  $region1: #{tpu_custom_call.1} parent=0
    #allocation2 [shape = 'u8[65536]{0}', space=vmem, size = 0x10000, scoped, tag = 'input window, operand 0, single buffered']
    #allocation3 [shape = 's32[1]{0}', space=sflag, size = 0x4, scoped, tag = 'scoped memory for tpu_custom_call.1']
    #allocation4 [shape = 's32[1]{0}', space=sflag, size = 0x4, scoped, tag = 'scoped memory for tpu_custom_call.1']
    #allocation5 [shape = 'u8[786432]{0}', space=vmem, size = 0xc0000, scoped, tag = 'input window, operand 1, single buffered']
    #allocation6 [shape = 's32[1]{0}', space=sflag, size = 0x4, scoped, tag = 'scoped memory for tpu_custom_call.1']
    #allocation7 [shape = 'u8[65536]{0}', space=vmem, size = 0x10000, scoped, tag = 'output window, operand 0, single buffered']
    %7 = vsyncpa [#allocation3], 0
    %8 = vsyncpa [#allocation6], 0
    %9 = vsyncpa [#allocation4], 0
    // Predicated region
    $region2: #{tpu_custom_call.1} parent=1 // pred_check
      _
    $region3: #{tpu_custom_call.1} parent=1 // pred_check_branch
      %11 = sbr.rel (0) target = $region5
    $region4: #{tpu_custom_call.1} parent=1 // pred_region
      %s13 = ssub.s32 2048, 2048
      %14 = vsyncadd [#allocation3], %s13
      %s15 = sshll.u32 [#allocation2], 4
      %s16 = int_to_ptr.vmem [resolvable:$true] %s15
      %21 = dma.hbm_to_vmem [thread:$0]  %s0, 2048, %s16, [#allocation3], 256, 256, 16
    $region5: #{tpu_custom_call.1} parent=1 // pred_fallthru
      _
    // Predicated region
    $region6: #{tpu_custom_call.1} parent=1 // pred_check
      _
    $region7: #{tpu_custom_call.1} parent=1 // pred_check_branch
      %23 = sbr.rel (0) target = $region9
    $region8: #{tpu_custom_call.1} parent=1 // pred_region
      %s25 = ssub.s32 24576, 24576
      %26 = vsyncadd [#allocation6], %s25
      %s27 = sshll.u32 [#allocation5], 4
      %s28 = int_to_ptr.vmem [resolvable:$true] %s27
      %33 = dma.hbm_to_vmem [thread:$0]  %s1, 24576, %s28, [#allocation6], 256, 256, 16
    $region9: #{tpu_custom_call.1} parent=1 // pred_fallthru
      _
    // Predicated region
    $region10: #{tpu_custom_call.1} parent=1 // pred_check
      _
    $region11: #{tpu_custom_call.1} parent=1 // pred_check_branch
      %35 = sbr.rel (0) target = $region13
    $region12: #{tpu_custom_call.1} parent=1 // pred_region
      %36 = dma.done [#allocation3], 2048
    $region13: #{tpu_custom_call.1} parent=1 // pred_fallthru
      _
    // Predicated region
    $region14: #{tpu_custom_call.1} parent=1 // pred_check
      _
    $region15: #{tpu_custom_call.1} parent=1 // pred_check_branch
      %38 = sbr.rel (0) target = $region17
    $region16: #{tpu_custom_call.1} parent=1 // pred_region
      %39 = dma.done [#allocation6], 24576
    $region17: #{tpu_custom_call.1} parent=1 // pred_fallthru
      _
    %v40 = vld [vmem:[#allocation2] sm:$0xff]
    %v41 = vld [vmem:[#allocation2 + $0x8] sm:$0xff]
    %v42 = vld [vmem:[#allocation2 + $0x10] sm:$0xff]
    %v43 = vld [vmem:[#allocation2 + $0x18] sm:$0xff]
    %v44 = vld [vmem:[#allocation2 + $0x20] sm:$0xff]
    %v45 = vld [vmem:[#allocation2 + $0x28] sm:$0xff]
    %v46 = vld [vmem:[#allocation2 + $0x30] sm:$0xff]
    %v47 = vld [vmem:[#allocation2 + $0x38] sm:$0xff]
    %v48 = vld [vmem:[#allocation2 + $0x40] sm:$0xff]
    %v49 = vld [vmem:[#allocation2 + $0x48] sm:$0xff]
    %v50 = vld [vmem:[#allocation2 + $0x50] sm:$0xff]
    %v51 = vld [vmem:[#allocation2 + $0x58] sm:$0xff]
    %v52 = vld [vmem:[#allocation2 + $0x60] sm:$0xff]
    %v53 = vld [vmem:[#allocation2 + $0x68] sm:$0xff]
    %v54 = vld [vmem:[#allocation2 + $0x70] sm:$0xff]
    %v55 = vld [vmem:[#allocation2 + $0x78] sm:$0xff]
    %s56 = scalar_lea.vmem [#allocation5], 1024
    %v57 = vld [vmem:[%s56] sm:$0xff]
    %v58 = vld [vmem:[%s56 + $0x8] sm:$0xff]
    %v59 = vld [vmem:[%s56 + $0x10] sm:$0xff]
    %v60 = vld [vmem:[%s56 + $0x18] sm:$0xff]
    %v61 = vld [vmem:[%s56 + $0x20] sm:$0xff]
    %v62 = vld [vmem:[%s56 + $0x28] sm:$0xff]
    %v63 = vld [vmem:[%s56 + $0x30] sm:$0xff]
    %v64 = vld [vmem:[%s56 + $0x38] sm:$0xff]
    %v65 = vld [vmem:[%s56 + $0x40] sm:$0xff]
    %v66 = vld [vmem:[%s56 + $0x48] sm:$0xff]
    %v67 = vld [vmem:[%s56 + $0x50] sm:$0xff]
    %v68 = vld [vmem:[%s56 + $0x58] sm:$0xff]
    %v69 = vld [vmem:[%s56 + $0x60] sm:$0xff]
    %v70 = vld [vmem:[%s56 + $0x68] sm:$0xff]
    %v71 = vld [vmem:[%s56 + $0x70] sm:$0xff]
    %v72 = vld [vmem:[%s56 + $0x78] sm:$0xff]
    %s73 = scalar_lea.vmem [#allocation5], 1152
    %v74 = vld [vmem:[%s73] sm:$0xff]
    %v75 = vld [vmem:[%s73 + $0x8] sm:$0xff]
    %v76 = vld [vmem:[%s73 + $0x10] sm:$0xff]
    %v77 = vld [vmem:[%s73 + $0x18] sm:$0xff]
    %v78 = vld [vmem:[%s73 + $0x20] sm:$0xff]
    %v79 = vld [vmem:[%s73 + $0x28] sm:$0xff]
    %v80 = vld [vmem:[%s73 + $0x30] sm:$0xff]
    %v81 = vld [vmem:[%s73 + $0x38] sm:$0xff]
    %v82 = vld [vmem:[%s73 + $0x40] sm:$0xff]
    %v83 = vld [vmem:[%s73 + $0x48] sm:$0xff]
    %v84 = vld [vmem:[%s73 + $0x50] sm:$0xff]
    %v85 = vld [vmem:[%s73 + $0x58] sm:$0xff]
    %v86 = vld [vmem:[%s73 + $0x60] sm:$0xff]
    %v87 = vld [vmem:[%s73 + $0x68] sm:$0xff]
    %v88 = vld [vmem:[%s73 + $0x70] sm:$0xff]
    %v89 = vld [vmem:[%s73 + $0x78] sm:$0xff]
    %v90 = vmax.f32 %v57, %v74
    %v91 = vmax.f32 %v58, %v75
    %v92 = vmax.f32 %v59, %v76
    %v93 = vmax.f32 %v60, %v77
    %v94 = vmax.f32 %v61, %v78
    %v95 = vmax.f32 %v62, %v79
    %v96 = vmax.f32 %v63, %v80
    %v97 = vmax.f32 %v64, %v81
    %v98 = vmax.f32 %v65, %v82
    %v99 = vmax.f32 %v66, %v83
    %v100 = vmax.f32 %v67, %v84
    %v101 = vmax.f32 %v68, %v85
    %v102 = vmax.f32 %v69, %v86
    %v103 = vmax.f32 %v70, %v87
    %v104 = vmax.f32 %v71, %v88
    %v105 = vmax.f32 %v72, %v89
    %s106 = scalar_lea.vmem [#allocation5], 1280
    %v107 = vld [vmem:[%s106] sm:$0xff]
    %v108 = vld [vmem:[%s106 + $0x8] sm:$0xff]
    %v109 = vld [vmem:[%s106 + $0x10] sm:$0xff]
    %v110 = vld [vmem:[%s106 + $0x18] sm:$0xff]
    %v111 = vld [vmem:[%s106 + $0x20] sm:$0xff]
    %v112 = vld [vmem:[%s106 + $0x28] sm:$0xff]
    %v113 = vld [vmem:[%s106 + $0x30] sm:$0xff]
    %v114 = vld [vmem:[%s106 + $0x38] sm:$0xff]
    %v115 = vld [vmem:[%s106 + $0x40] sm:$0xff]
    %v116 = vld [vmem:[%s106 + $0x48] sm:$0xff]
    %v117 = vld [vmem:[%s106 + $0x50] sm:$0xff]
    %v118 = vld [vmem:[%s106 + $0x58] sm:$0xff]
    %v119 = vld [vmem:[%s106 + $0x60] sm:$0xff]
    %v120 = vld [vmem:[%s106 + $0x68] sm:$0xff]
    %v121 = vld [vmem:[%s106 + $0x70] sm:$0xff]
    %v122 = vld [vmem:[%s106 + $0x78] sm:$0xff]
    %v123 = vmax.f32 %v90, %v107
    %v124 = vmax.f32 %v91, %v108
    %v125 = vmax.f32 %v92, %v109
    %v126 = vmax.f32 %v93, %v110
    %v127 = vmax.f32 %v94, %v111
    %v128 = vmax.f32 %v95, %v112
    %v129 = vmax.f32 %v96, %v113
    %v130 = vmax.f32 %v97, %v114
    %v131 = vmax.f32 %v98, %v115
    %v132 = vmax.f32 %v99, %v116
    %v133 = vmax.f32 %v100, %v117
    %v134 = vmax.f32 %v101, %v118
    %v135 = vmax.f32 %v102, %v119
    %v136 = vmax.f32 %v103, %v120
    %v137 = vmax.f32 %v104, %v121
    %v138 = vmax.f32 %v105, %v122
    %s139 = scalar_lea.vmem [#allocation5], 1408
    %v140 = vld [vmem:[%s139] sm:$0xff]
    %v141 = vld [vmem:[%s139 + $0x8] sm:$0xff]
    %v142 = vld [vmem:[%s139 + $0x10] sm:$0xff]
    %v143 = vld [vmem:[%s139 + $0x18] sm:$0xff]
    %v144 = vld [vmem:[%s139 + $0x20] sm:$0xff]
    %v145 = vld [vmem:[%s139 + $0x28] sm:$0xff]
    %v146 = vld [vmem:[%s139 + $0x30] sm:$0xff]
    %v147 = vld [vmem:[%s139 + $0x38] sm:$0xff]
    %v148 = vld [vmem:[%s139 + $0x40] sm:$0xff]
    %v149 = vld [vmem:[%s139 + $0x48] sm:$0xff]
    %v150 = vld [vmem:[%s139 + $0x50] sm:$0xff]
    %v151 = vld [vmem:[%s139 + $0x58] sm:$0xff]
    %v152 = vld [vmem:[%s139 + $0x60] sm:$0xff]
    %v153 = vld [vmem:[%s139 + $0x68] sm:$0xff]
    %v154 = vld [vmem:[%s139 + $0x70] sm:$0xff]
    %v155 = vld [vmem:[%s139 + $0x78] sm:$0xff]
    %v156 = vmax.f32 %v123, %v140
    %v157 = vmax.f32 %v124, %v141
    %v158 = vmax.f32 %v125, %v142
    %v159 = vmax.f32 %v126, %v143
    %v160 = vmax.f32 %v127, %v144
    %v161 = vmax.f32 %v128, %v145
    %v162 = vmax.f32 %v129, %v146
    %v163 = vmax.f32 %v130, %v147
    %v164 = vmax.f32 %v131, %v148
    %v165 = vmax.f32 %v132, %v149
    %v166 = vmax.f32 %v133, %v150
    %v167 = vmax.f32 %v134, %v151
    %v168 = vmax.f32 %v135, %v152
    %v169 = vmax.f32 %v136, %v153
    %v170 = vmax.f32 %v137, %v154
    %v171 = vmax.f32 %v138, %v155
    %v172 = vld [vmem:[#allocation5] sm:$0xff]
    %v173 = vld [vmem:[#allocation5 + $0x8] sm:$0xff]
    %v174 = vld [vmem:[#allocation5 + $0x10] sm:$0xff]
    %v175 = vld [vmem:[#allocation5 + $0x18] sm:$0xff]
    %v176 = vld [vmem:[#allocation5 + $0x20] sm:$0xff]
    %v177 = vld [vmem:[#allocation5 + $0x28] sm:$0xff]
    %v178 = vld [vmem:[#allocation5 + $0x30] sm:$0xff]
    %v179 = vld [vmem:[#allocation5 + $0x38] sm:$0xff]
    %v180 = vld [vmem:[#allocation5 + $0x40] sm:$0xff]
    %v181 = vld [vmem:[#allocation5 + $0x48] sm:$0xff]
    %v182 = vld [vmem:[#allocation5 + $0x50] sm:$0xff]
    %v183 = vld [vmem:[#allocation5 + $0x58] sm:$0xff]
    %v184 = vld [vmem:[#allocation5 + $0x60] sm:$0xff]
    %v185 = vld [vmem:[#allocation5 + $0x68] sm:$0xff]
    %v186 = vld [vmem:[#allocation5 + $0x70] sm:$0xff]
    %v187 = vld [vmem:[#allocation5 + $0x78] sm:$0xff]
    %v188 = vmax.f32 %v172, 0.0
    %v189 = vmax.f32 %v173, 0.0
    %v190 = vmax.f32 %v174, 0.0
    %v191 = vmax.f32 %v175, 0.0
    %v192 = vmax.f32 %v176, 0.0
    %v193 = vmax.f32 %v177, 0.0
    %v194 = vmax.f32 %v178, 0.0
    %v195 = vmax.f32 %v179, 0.0
    %v196 = vmax.f32 %v180, 0.0
    %v197 = vmax.f32 %v181, 0.0
    %v198 = vmax.f32 %v182, 0.0
    %v199 = vmax.f32 %v183, 0.0
    %v200 = vmax.f32 %v184, 0.0
    %v201 = vmax.f32 %v185, 0.0
    %v202 = vmax.f32 %v186, 0.0
    %v203 = vmax.f32 %v187, 0.0
    %v204 = vand.u32 2147483647, %v172
    %v205 = vand.u32 2147483647, %v173
    %v206 = vand.u32 2147483647, %v174
    %v207 = vand.u32 2147483647, %v175
    %v208 = vand.u32 2147483647, %v176
    %v209 = vand.u32 2147483647, %v177
    %v210 = vand.u32 2147483647, %v178
    %v211 = vand.u32 2147483647, %v179
    %v212 = vand.u32 2147483647, %v180
    %v213 = vand.u32 2147483647, %v181
    %v214 = vand.u32 2147483647, %v182
    %v215 = vand.u32 2147483647, %v183
    %v216 = vand.u32 2147483647, %v184
    %v217 = vand.u32 2147483647, %v185
    %v218 = vand.u32 2147483647, %v186
    %v219 = vand.u32 2147483647, %v187
    %v220 = vsub.f32 0.0, %v204
    %v221 = vsub.f32 0.0, %v205
    %v222 = vsub.f32 0.0, %v206
    %v223 = vsub.f32 0.0, %v207
    %v224 = vsub.f32 0.0, %v208
    %v225 = vsub.f32 0.0, %v209
    %v226 = vsub.f32 0.0, %v210
    %v227 = vsub.f32 0.0, %v211
    %v228 = vsub.f32 0.0, %v212
    %v229 = vsub.f32 0.0, %v213
    %v230 = vsub.f32 0.0, %v214
    %v231 = vsub.f32 0.0, %v215
    %v232 = vsub.f32 0.0, %v216
    %v233 = vsub.f32 0.0, %v217
    %v234 = vsub.f32 0.0, %v218
    %v235 = vsub.f32 0.0, %v219
    %v236 = vmul.f32 %v220, 1.442695
    %v237 = vpow.pop %v236
    %v238 = vmul.f32 %v221, 1.442695
    %v239 = vpow.pop %v238
    %v240 = vmul.f32 %v222, 1.442695
    %v241 = vpow.pop %v240
    %v242 = vmul.f32 %v223, 1.442695
    %v243 = vpow.pop %v242
    %v244 = vmul.f32 %v224, 1.442695
    %v245 = vpow.pop %v244
    %v246 = vmul.f32 %v225, 1.442695
    %v247 = vpow.pop %v246
    %v248 = vmul.f32 %v226, 1.442695
    %v249 = vpow.pop %v248
    %v250 = vmul.f32 %v227, 1.442695
    %v251 = vpow.pop %v250
    %v252 = vmul.f32 %v228, 1.442695
    %v253 = vpow.pop %v252
    %v254 = vmul.f32 %v229, 1.442695
    %v255 = vpow.pop %v254
    %v256 = vmul.f32 %v230, 1.442695
    %v257 = vpow.pop %v256
    %v258 = vmul.f32 %v231, 1.442695
    %v259 = vpow.pop %v258
    %v260 = vmul.f32 %v232, 1.442695
    %v261 = vpow.pop %v260
    %v262 = vmul.f32 %v233, 1.442695
    %v263 = vpow.pop %v262
    %v264 = vmul.f32 %v234, 1.442695
    %v265 = vpow.pop %v264
    %v266 = vmul.f32 %v235, 1.442695
    %v267 = vpow.pop %v266
    %v268 = vadd.f32 %v237, 1.0
    %v269 = vadd.f32 %v239, 1.0
    %v270 = vadd.f32 %v241, 1.0
    %v271 = vadd.f32 %v243, 1.0
    %v272 = vadd.f32 %v245, 1.0
    %v273 = vadd.f32 %v247, 1.0
    %v274 = vadd.f32 %v249, 1.0
    %v275 = vadd.f32 %v251, 1.0
    %v276 = vadd.f32 %v253, 1.0
    %v277 = vadd.f32 %v255, 1.0
    %v278 = vadd.f32 %v257, 1.0
    %v279 = vadd.f32 %v259, 1.0
    %v280 = vadd.f32 %v261, 1.0
    %v281 = vadd.f32 %v263, 1.0
    %v282 = vadd.f32 %v265, 1.0
    %v283 = vadd.f32 %v267, 1.0
    %v284 = vlog2.pop %v268
    %v285 = vmul.f32 %v284, 0.6931472
    %v286 = vlog2.pop %v269
    %v287 = vmul.f32 %v286, 0.6931472
    %v288 = vlog2.pop %v270
    %v289 = vmul.f32 %v288, 0.6931472
    %v290 = vlog2.pop %v271
    %v291 = vmul.f32 %v290, 0.6931472
    %v292 = vlog2.pop %v272
    %v293 = vmul.f32 %v292, 0.6931472
    %v294 = vlog2.pop %v273
    %v295 = vmul.f32 %v294, 0.6931472
    %v296 = vlog2.pop %v274
    %v297 = vmul.f32 %v296, 0.6931472
    %v298 = vlog2.pop %v275
    %v299 = vmul.f32 %v298, 0.6931472
    %v300 = vlog2.pop %v276
    %v301 = vmul.f32 %v300, 0.6931472
    %v302 = vlog2.pop %v277
    %v303 = vmul.f32 %v302, 0.6931472
    %v304 = vlog2.pop %v278
    %v305 = vmul.f32 %v304, 0.6931472
    %v306 = vlog2.pop %v279
    %v307 = vmul.f32 %v306, 0.6931472
    %v308 = vlog2.pop %v280
    %v309 = vmul.f32 %v308, 0.6931472
    %v310 = vlog2.pop %v281
    %v311 = vmul.f32 %v310, 0.6931472
    %v312 = vlog2.pop %v282
    %v313 = vmul.f32 %v312, 0.6931472
    %v314 = vlog2.pop %v283
    %v315 = vmul.f32 %v314, 0.6931472
    %v316 = vadd.f32 %v188, %v285
    %v317 = vadd.f32 %v189, %v287
    %v318 = vadd.f32 %v190, %v289
    %v319 = vadd.f32 %v191, %v291
    %v320 = vadd.f32 %v192, %v293
    %v321 = vadd.f32 %v193, %v295
    %v322 = vadd.f32 %v194, %v297
    %v323 = vadd.f32 %v195, %v299
    %v324 = vadd.f32 %v196, %v301
    %v325 = vadd.f32 %v197, %v303
    %v326 = vadd.f32 %v198, %v305
    %v327 = vadd.f32 %v199, %v307
    %v328 = vadd.f32 %v200, %v309
    %v329 = vadd.f32 %v201, %v311
    %v330 = vadd.f32 %v202, %v313
    %v331 = vadd.f32 %v203, %v315
    %v332 = vadd.f32 %v316, 1e-06
    %v333 = vadd.f32 %v317, 1e-06
    %v334 = vadd.f32 %v318, 1e-06
    %v335 = vadd.f32 %v319, 1e-06
    %v336 = vadd.f32 %v320, 1e-06
    %v337 = vadd.f32 %v321, 1e-06
    %v338 = vadd.f32 %v322, 1e-06
    %v339 = vadd.f32 %v323, 1e-06
    %v340 = vadd.f32 %v324, 1e-06
    %v341 = vadd.f32 %v325, 1e-06
    %v342 = vadd.f32 %v326, 1e-06
    %v343 = vadd.f32 %v327, 1e-06
    %v344 = vadd.f32 %v328, 1e-06
    %v345 = vadd.f32 %v329, 1e-06
    %v346 = vadd.f32 %v330, 1e-06
    %v347 = vadd.f32 %v331, 1e-06
    %s348 = scalar_lea.vmem [#allocation5], 512
    %v349 = vld [vmem:[%s348] sm:$0xff]
    %v350 = vld [vmem:[%s348 + $0x8] sm:$0xff]
    %v351 = vld [vmem:[%s348 + $0x10] sm:$0xff]
    %v352 = vld [vmem:[%s348 + $0x18] sm:$0xff]
    %v353 = vld [vmem:[%s348 + $0x20] sm:$0xff]
    %v354 = vld [vmem:[%s348 + $0x28] sm:$0xff]
    %v355 = vld [vmem:[%s348 + $0x30] sm:$0xff]
    %v356 = vld [vmem:[%s348 + $0x38] sm:$0xff]
    %v357 = vld [vmem:[%s348 + $0x40] sm:$0xff]
    %v358 = vld [vmem:[%s348 + $0x48] sm:$0xff]
    %v359 = vld [vmem:[%s348 + $0x50] sm:$0xff]
    %v360 = vld [vmem:[%s348 + $0x58] sm:$0xff]
    %v361 = vld [vmem:[%s348 + $0x60] sm:$0xff]
    %v362 = vld [vmem:[%s348 + $0x68] sm:$0xff]
    %v363 = vld [vmem:[%s348 + $0x70] sm:$0xff]
    %v364 = vld [vmem:[%s348 + $0x78] sm:$0xff]
    %v365 = vsub.f32 %v57, %v156
    %v366 = vsub.f32 %v58, %v157
    %v367 = vsub.f32 %v59, %v158
    %v368 = vsub.f32 %v60, %v159
    %v369 = vsub.f32 %v61, %v160
    %v370 = vsub.f32 %v62, %v161
    %v371 = vsub.f32 %v63, %v162
    %v372 = vsub.f32 %v64, %v163
    %v373 = vsub.f32 %v65, %v164
    %v374 = vsub.f32 %v66, %v165
    %v375 = vsub.f32 %v67, %v166
    %v376 = vsub.f32 %v68, %v167
    %v377 = vsub.f32 %v69, %v168
    %v378 = vsub.f32 %v70, %v169
    %v379 = vsub.f32 %v71, %v170
    %v380 = vsub.f32 %v72, %v171
    %v381 = vmul.f32 %v365, 1.442695
    %v382 = vpow.pop %v381
    %v383 = vmul.f32 %v366, 1.442695
    %v384 = vpow.pop %v383
    %v385 = vmul.f32 %v367, 1.442695
    %v386 = vpow.pop %v385
    %v387 = vmul.f32 %v368, 1.442695
    %v388 = vpow.pop %v387
    %v389 = vmul.f32 %v369, 1.442695
    %v390 = vpow.pop %v389
    %v391 = vmul.f32 %v370, 1.442695
    %v392 = vpow.pop %v391
    %v393 = vmul.f32 %v371, 1.442695
    %v394 = vpow.pop %v393
    %v395 = vmul.f32 %v372, 1.442695
    %v396 = vpow.pop %v395
    %v397 = vmul.f32 %v373, 1.442695
    %v398 = vpow.pop %v397
    %v399 = vmul.f32 %v374, 1.442695
    %v400 = vpow.pop %v399
    %v401 = vmul.f32 %v375, 1.442695
    %v402 = vpow.pop %v401
    %v403 = vmul.f32 %v376, 1.442695
    %v404 = vpow.pop %v403
    %v405 = vmul.f32 %v377, 1.442695
    %v406 = vpow.pop %v405
    %v407 = vmul.f32 %v378, 1.442695
    %v408 = vpow.pop %v407
    %v409 = vmul.f32 %v379, 1.442695
    %v410 = vpow.pop %v409
    %v411 = vmul.f32 %v380, 1.442695
    %v412 = vpow.pop %v411
    %v413 = vmul.f32 %v332, %v40
    %v414 = vmul.f32 %v333, %v41
    %v415 = vmul.f32 %v334, %v42
    %v416 = vmul.f32 %v335, %v43
    %v417 = vmul.f32 %v336, %v44
    %v418 = vmul.f32 %v337, %v45
    %v419 = vmul.f32 %v338, %v46
    %v420 = vmul.f32 %v339, %v47
    %v421 = vmul.f32 %v340, %v48
    %v422 = vmul.f32 %v341, %v49
    %v423 = vmul.f32 %v342, %v50
    %v424 = vmul.f32 %v343, %v51
    %v425 = vmul.f32 %v344, %v52
    %v426 = vmul.f32 %v345, %v53
    %v427 = vmul.f32 %v346, %v54
    %v428 = vmul.f32 %v347, %v55
    %v429 = vadd.f32 %v413, %v349
    %v430 = vadd.f32 %v414, %v350
    %v431 = vadd.f32 %v415, %v351
    %v432 = vadd.f32 %v416, %v352
    %v433 = vadd.f32 %v417, %v353
    %v434 = vadd.f32 %v418, %v354
    %v435 = vadd.f32 %v419, %v355
    %v436 = vadd.f32 %v420, %v356
    %v437 = vadd.f32 %v421, %v357
    %v438 = vadd.f32 %v422, %v358
    %v439 = vadd.f32 %v423, %v359
    %v440 = vadd.f32 %v424, %v360
    %v441 = vadd.f32 %v425, %v361
    %v442 = vadd.f32 %v426, %v362
    %v443 = vadd.f32 %v427, %v363
    %v444 = vadd.f32 %v428, %v364
    %v445 = vmul.f32 %v429, 0.5
    %v446 = vmul.f32 %v430, 0.5
    %v447 = vmul.f32 %v431, 0.5
    %v448 = vmul.f32 %v432, 0.5
    %v449 = vmul.f32 %v433, 0.5
    %v450 = vmul.f32 %v434, 0.5
    %v451 = vmul.f32 %v435, 0.5
    %v452 = vmul.f32 %v436, 0.5
    %v453 = vmul.f32 %v437, 0.5
    %v454 = vmul.f32 %v438, 0.5
    %v455 = vmul.f32 %v439, 0.5
    %v456 = vmul.f32 %v440, 0.5
    %v457 = vmul.f32 %v441, 0.5
    %v458 = vmul.f32 %v442, 0.5
    %v459 = vmul.f32 %v443, 0.5
    %v460 = vmul.f32 %v444, 0.5
    %v461 = vtanh.pop %v445
    %v462 = vtanh.pop %v446
    %v463 = vtanh.pop %v447
    %v464 = vtanh.pop %v448
    %v465 = vtanh.pop %v449
    %v466 = vtanh.pop %v450
    %v467 = vtanh.pop %v451
    %v468 = vtanh.pop %v452
    %v469 = vtanh.pop %v453
    %v470 = vtanh.pop %v454
    %v471 = vtanh.pop %v455
    %v472 = vtanh.pop %v456
    %v473 = vtanh.pop %v457
    %v474 = vtanh.pop %v458
    %v475 = vtanh.pop %v459
    %v476 = vtanh.pop %v460
    %v477 = vadd.f32 %v461, 1.0
    %v478 = vadd.f32 %v462, 1.0
    %v479 = vadd.f32 %v463, 1.0
    %v480 = vadd.f32 %v464, 1.0
    %v481 = vadd.f32 %v465, 1.0
    %v482 = vadd.f32 %v466, 1.0
    %v483 = vadd.f32 %v467, 1.0
    %v484 = vadd.f32 %v468, 1.0
    %v485 = vadd.f32 %v469, 1.0
    %v486 = vadd.f32 %v470, 1.0
    %v487 = vadd.f32 %v471, 1.0
    %v488 = vadd.f32 %v472, 1.0
    %v489 = vadd.f32 %v473, 1.0
    %v490 = vadd.f32 %v474, 1.0
    %v491 = vadd.f32 %v475, 1.0
    %v492 = vadd.f32 %v476, 1.0
    %v493 = vmul.f32 %v477, 0.5
    %v494 = vmul.f32 %v478, 0.5
    %v495 = vmul.f32 %v479, 0.5
    %v496 = vmul.f32 %v480, 0.5
    %v497 = vmul.f32 %v481, 0.5
    %v498 = vmul.f32 %v482, 0.5
    %v499 = vmul.f32 %v483, 0.5
    %v500 = vmul.f32 %v484, 0.5
    %v501 = vmul.f32 %v485, 0.5
    %v502 = vmul.f32 %v486, 0.5
    %v503 = vmul.f32 %v487, 0.5
    %v504 = vmul.f32 %v488, 0.5
    %v505 = vmul.f32 %v489, 0.5
    %v506 = vmul.f32 %v490, 0.5
    %v507 = vmul.f32 %v491, 0.5
    %v508 = vmul.f32 %v492, 0.5
    %v509 = vmul.f32 %v382, %v493
    %v510 = vmul.f32 %v384, %v494
    %v511 = vmul.f32 %v386, %v495
    %v512 = vmul.f32 %v388, %v496
    %v513 = vmul.f32 %v390, %v497
    %v514 = vmul.f32 %v392, %v498
    %v515 = vmul.f32 %v394, %v499
    %v516 = vmul.f32 %v396, %v500
    %v517 = vmul.f32 %v398, %v501
    %v518 = vmul.f32 %v400, %v502
    %v519 = vmul.f32 %v402, %v503
    %v520 = vmul.f32 %v404, %v504
    %v521 = vmul.f32 %v406, %v505
    %v522 = vmul.f32 %v408, %v506
    %v523 = vmul.f32 %v410, %v507
    %v524 = vmul.f32 %v412, %v508
    %v525 = vadd.f32 %v509, 0.0
    %v526 = vadd.f32 %v510, 0.0
    %v527 = vadd.f32 %v511, 0.0
    %v528 = vadd.f32 %v512, 0.0
    %v529 = vadd.f32 %v513, 0.0
    %v530 = vadd.f32 %v514, 0.0
    %v531 = vadd.f32 %v515, 0.0
    %v532 = vadd.f32 %v516, 0.0
    %v533 = vadd.f32 %v517, 0.0
    %v534 = vadd.f32 %v518, 0.0
    %v535 = vadd.f32 %v519, 0.0
    %v536 = vadd.f32 %v520, 0.0
    %v537 = vadd.f32 %v521, 0.0
    %v538 = vadd.f32 %v522, 0.0
    %v539 = vadd.f32 %v523, 0.0
    %v540 = vadd.f32 %v524, 0.0
    %v541 = vadd.f32 %v382, 0.0
    %v542 = vadd.f32 %v384, 0.0
    %v543 = vadd.f32 %v386, 0.0
    %v544 = vadd.f32 %v388, 0.0
    %v545 = vadd.f32 %v390, 0.0
    %v546 = vadd.f32 %v392, 0.0
    %v547 = vadd.f32 %v394, 0.0
    %v548 = vadd.f32 %v396, 0.0
    %v549 = vadd.f32 %v398, 0.0
    %v550 = vadd.f32 %v400, 0.0
    %v551 = vadd.f32 %v402, 0.0
    %v552 = vadd.f32 %v404, 0.0
    %v553 = vadd.f32 %v406, 0.0
    %v554 = vadd.f32 %v408, 0.0
    %v555 = vadd.f32 %v410, 0.0
    %v556 = vadd.f32 %v412, 0.0
    %s557 = scalar_lea.vmem [#allocation5], 128
    %v558 = vld [vmem:[%s557] sm:$0xff]
    %v559 = vld [vmem:[%s557 + $0x8] sm:$0xff]
    %v560 = vld [vmem:[%s557 + $0x10] sm:$0xff]
    %v561 = vld [vmem:[%s557 + $0x18] sm:$0xff]
    %v562 = vld [vmem:[%s557 + $0x20] sm:$0xff]
    %v563 = vld [vmem:[%s557 + $0x28] sm:$0xff]
    %v564 = vld [vmem:[%s557 + $0x30] sm:$0xff]
    %v565 = vld [vmem:[%s557 + $0x38] sm:$0xff]
    %v566 = vld [vmem:[%s557 + $0x40] sm:$0xff]
    %v567 = vld [vmem:[%s557 + $0x48] sm:$0xff]
    %v568 = vld [vmem:[%s557 + $0x50] sm:$0xff]
    %v569 = vld [vmem:[%s557 + $0x58] sm:$0xff]
    %v570 = vld [vmem:[%s557 + $0x60] sm:$0xff]
    %v571 = vld [vmem:[%s557 + $0x68] sm:$0xff]
    %v572 = vld [vmem:[%s557 + $0x70] sm:$0xff]
    %v573 = vld [vmem:[%s557 + $0x78] sm:$0xff]
    %v574 = vmax.f32 %v558, 0.0
    %v575 = vmax.f32 %v559, 0.0
    %v576 = vmax.f32 %v560, 0.0
    %v577 = vmax.f32 %v561, 0.0
    %v578 = vmax.f32 %v562, 0.0
    %v579 = vmax.f32 %v563, 0.0
    %v580 = vmax.f32 %v564, 0.0
    %v581 = vmax.f32 %v565, 0.0
    %v582 = vmax.f32 %v566, 0.0
    %v583 = vmax.f32 %v567, 0.0
    %v584 = vmax.f32 %v568, 0.0
    %v585 = vmax.f32 %v569, 0.0
    %v586 = vmax.f32 %v570, 0.0
    %v587 = vmax.f32 %v571, 0.0
    %v588 = vmax.f32 %v572, 0.0
    %v589 = vmax.f32 %v573, 0.0
    %v590 = vand.u32 2147483647, %v558
    %v591 = vand.u32 2147483647, %v559
    %v592 = vand.u32 2147483647, %v560
    %v593 = vand.u32 2147483647, %v561
    %v594 = vand.u32 2147483647, %v562
    %v595 = vand.u32 2147483647, %v563
    %v596 = vand.u32 2147483647, %v564
    %v597 = vand.u32 2147483647, %v565
    %v598 = vand.u32 2147483647, %v566
    %v599 = vand.u32 2147483647, %v567
    %v600 = vand.u32 2147483647, %v568
    %v601 = vand.u32 2147483647, %v569
    %v602 = vand.u32 2147483647, %v570
    %v603 = vand.u32 2147483647, %v571
    %v604 = vand.u32 2147483647, %v572
    %v605 = vand.u32 2147483647, %v573
    %v606 = vsub.f32 0.0, %v590
    %v607 = vsub.f32 0.0, %v591
    %v608 = vsub.f32 0.0, %v592
    %v609 = vsub.f32 0.0, %v593
    %v610 = vsub.f32 0.0, %v594
    %v611 = vsub.f32 0.0, %v595
    %v612 = vsub.f32 0.0, %v596
    %v613 = vsub.f32 0.0, %v597
    %v614 = vsub.f32 0.0, %v598
    %v615 = vsub.f32 0.0, %v599
    %v616 = vsub.f32 0.0, %v600
    %v617 = vsub.f32 0.0, %v601
    %v618 = vsub.f32 0.0, %v602
    %v619 = vsub.f32 0.0, %v603
    %v620 = vsub.f32 0.0, %v604
    %v621 = vsub.f32 0.0, %v605
    %v622 = vmul.f32 %v606, 1.442695
    %v623 = vpow.pop %v622
    %v624 = vmul.f32 %v607, 1.442695
    %v625 = vpow.pop %v624
    %v626 = vmul.f32 %v608, 1.442695
    %v627 = vpow.pop %v626
    %v628 = vmul.f32 %v609, 1.442695
    %v629 = vpow.pop %v628
    %v630 = vmul.f32 %v610, 1.442695
    %v631 = vpow.pop %v630
    %v632 = vmul.f32 %v611, 1.442695
    %v633 = vpow.pop %v632
    %v634 = vmul.f32 %v612, 1.442695
    %v635 = vpow.pop %v634
    %v636 = vmul.f32 %v613, 1.442695
    %v637 = vpow.pop %v636
    %v638 = vmul.f32 %v614, 1.442695
    %v639 = vpow.pop %v638
    %v640 = vmul.f32 %v615, 1.442695
    %v641 = vpow.pop %v640
    %v642 = vmul.f32 %v616, 1.442695
    %v643 = vpow.pop %v642
    %v644 = vmul.f32 %v617, 1.442695
    %v645 = vpow.pop %v644
    %v646 = vmul.f32 %v618, 1.442695
    %v647 = vpow.pop %v646
    %v648 = vmul.f32 %v619, 1.442695
    %v649 = vpow.pop %v648
    %v650 = vmul.f32 %v620, 1.442695
    %v651 = vpow.pop %v650
    %v652 = vmul.f32 %v621, 1.442695
    %v653 = vpow.pop %v652
    %v654 = vadd.f32 %v623, 1.0
    %v655 = vadd.f32 %v625, 1.0
    %v656 = vadd.f32 %v627, 1.0
    %v657 = vadd.f32 %v629, 1.0
    %v658 = vadd.f32 %v631, 1.0
    %v659 = vadd.f32 %v633, 1.0
    %v660 = vadd.f32 %v635, 1.0
    %v661 = vadd.f32 %v637, 1.0
    %v662 = vadd.f32 %v639, 1.0
    %v663 = vadd.f32 %v641, 1.0
    %v664 = vadd.f32 %v643, 1.0
    %v665 = vadd.f32 %v645, 1.0
    %v666 = vadd.f32 %v647, 1.0
    %v667 = vadd.f32 %v649, 1.0
    %v668 = vadd.f32 %v651, 1.0
    %v669 = vadd.f32 %v653, 1.0
    %v670 = vlog2.pop %v654
    %v671 = vmul.f32 %v670, 0.6931472
    %v672 = vlog2.pop %v655
    %v673 = vmul.f32 %v672, 0.6931472
    %v674 = vlog2.pop %v656
    %v675 = vmul.f32 %v674, 0.6931472
    %v676 = vlog2.pop %v657
    %v677 = vmul.f32 %v676, 0.6931472
    %v678 = vlog2.pop %v658
    %v679 = vmul.f32 %v678, 0.6931472
    %v680 = vlog2.pop %v659
    %v681 = vmul.f32 %v680, 0.6931472
    %v682 = vlog2.pop %v660
    %v683 = vmul.f32 %v682, 0.6931472
    %v684 = vlog2.pop %v661
    %v685 = vmul.f32 %v684, 0.6931472
    %v686 = vlog2.pop %v662
    %v687 = vmul.f32 %v686, 0.6931472
    %v688 = vlog2.pop %v663
    %v689 = vmul.f32 %v688, 0.6931472
    %v690 = vlog2.pop %v664
    %v691 = vmul.f32 %v690, 0.6931472
    %v692 = vlog2.pop %v665
    %v693 = vmul.f32 %v692, 0.6931472
    %v694 = vlog2.pop %v666
    %v695 = vmul.f32 %v694, 0.6931472
    %v696 = vlog2.pop %v667
    %v697 = vmul.f32 %v696, 0.6931472
    %v698 = vlog2.pop %v668
    %v699 = vmul.f32 %v698, 0.6931472
    %v700 = vlog2.pop %v669
    %v701 = vmul.f32 %v700, 0.6931472
    %v702 = vadd.f32 %v574, %v671
    %v703 = vadd.f32 %v575, %v673
    %v704 = vadd.f32 %v576, %v675
    %v705 = vadd.f32 %v577, %v677
    %v706 = vadd.f32 %v578, %v679
    %v707 = vadd.f32 %v579, %v681
    %v708 = vadd.f32 %v580, %v683
    %v709 = vadd.f32 %v581, %v685
    %v710 = vadd.f32 %v582, %v687
    %v711 = vadd.f32 %v583, %v689
    %v712 = vadd.f32 %v584, %v691
    %v713 = vadd.f32 %v585, %v693
    %v714 = vadd.f32 %v586, %v695
    %v715 = vadd.f32 %v587, %v697
    %v716 = vadd.f32 %v588, %v699
    %v717 = vadd.f32 %v589, %v701
    %v718 = vadd.f32 %v702, 1e-06
    %v719 = vadd.f32 %v703, 1e-06
    %v720 = vadd.f32 %v704, 1e-06
    %v721 = vadd.f32 %v705, 1e-06
    %v722 = vadd.f32 %v706, 1e-06
    %v723 = vadd.f32 %v707, 1e-06
    %v724 = vadd.f32 %v708, 1e-06
    %v725 = vadd.f32 %v709, 1e-06
    %v726 = vadd.f32 %v710, 1e-06
    %v727 = vadd.f32 %v711, 1e-06
    %v728 = vadd.f32 %v712, 1e-06
    %v729 = vadd.f32 %v713, 1e-06
    %v730 = vadd.f32 %v714, 1e-06
    %v731 = vadd.f32 %v715, 1e-06
    %v732 = vadd.f32 %v716, 1e-06
    %v733 = vadd.f32 %v717, 1e-06
    %s734 = scalar_lea.vmem [#allocation5], 640
    %v735 = vld [vmem:[%s734] sm:$0xff]
    %v736 = vld [vmem:[%s734 + $0x8] sm:$0xff]
    %v737 = vld [vmem:[%s734 + $0x10] sm:$0xff]
    %v738 = vld [vmem:[%s734 + $0x18] sm:$0xff]
    %v739 = vld [vmem:[%s734 + $0x20] sm:$0xff]
    %v740 = vld [vmem:[%s734 + $0x28] sm:$0xff]
    %v741 = vld [vmem:[%s734 + $0x30] sm:$0xff]
    %v742 = vld [vmem:[%s734 + $0x38] sm:$0xff]
    %v743 = vld [vmem:[%s734 + $0x40] sm:$0xff]
    %v744 = vld [vmem:[%s734 + $0x48] sm:$0xff]
    %v745 = vld [vmem:[%s734 + $0x50] sm:$0xff]
    %v746 = vld [vmem:[%s734 + $0x58] sm:$0xff]
    %v747 = vld [vmem:[%s734 + $0x60] sm:$0xff]
    %v748 = vld [vmem:[%s734 + $0x68] sm:$0xff]
    %v749 = vld [vmem:[%s734 + $0x70] sm:$0xff]
    %v750 = vld [vmem:[%s734 + $0x78] sm:$0xff]
    %v751 = vsub.f32 %v74, %v156
    %v752 = vsub.f32 %v75, %v157
    %v753 = vsub.f32 %v76, %v158
    %v754 = vsub.f32 %v77, %v159
    %v755 = vsub.f32 %v78, %v160
    %v756 = vsub.f32 %v79, %v161
    %v757 = vsub.f32 %v80, %v162
    %v758 = vsub.f32 %v81, %v163
    %v759 = vsub.f32 %v82, %v164
    %v760 = vsub.f32 %v83, %v165
    %v761 = vsub.f32 %v84, %v166
    %v762 = vsub.f32 %v85, %v167
    %v763 = vsub.f32 %v86, %v168
    %v764 = vsub.f32 %v87, %v169
    %v765 = vsub.f32 %v88, %v170
    %v766 = vsub.f32 %v89, %v171
    %v767 = vmul.f32 %v751, 1.442695
    %v768 = vpow.pop %v767
    %v769 = vmul.f32 %v752, 1.442695
    %v770 = vpow.pop %v769
    %v771 = vmul.f32 %v753, 1.442695
    %v772 = vpow.pop %v771
    %v773 = vmul.f32 %v754, 1.442695
    %v774 = vpow.pop %v773
    %v775 = vmul.f32 %v755, 1.442695
    %v776 = vpow.pop %v775
    %v777 = vmul.f32 %v756, 1.442695
    %v778 = vpow.pop %v777
    %v779 = vmul.f32 %v757, 1.442695
    %v780 = vpow.pop %v779
    %v781 = vmul.f32 %v758, 1.442695
    %v782 = vpow.pop %v781
    %v783 = vmul.f32 %v759, 1.442695
    %v784 = vpow.pop %v783
    %v785 = vmul.f32 %v760, 1.442695
    %v786 = vpow.pop %v785
    %v787 = vmul.f32 %v761, 1.442695
    %v788 = vpow.pop %v787
    %v789 = vmul.f32 %v762, 1.442695
    %v790 = vpow.pop %v789
    %v791 = vmul.f32 %v763, 1.442695
    %v792 = vpow.pop %v791
    %v793 = vmul.f32 %v764, 1.442695
    %v794 = vpow.pop %v793
    %v795 = vmul.f32 %v765, 1.442695
    %v796 = vpow.pop %v795
    %v797 = vmul.f32 %v766, 1.442695
    %v798 = vpow.pop %v797
    %v799 = vmul.f32 %v718, %v40
    %v800 = vmul.f32 %v719, %v41
    %v801 = vmul.f32 %v720, %v42
    %v802 = vmul.f32 %v721, %v43
    %v803 = vmul.f32 %v722, %v44
    %v804 = vmul.f32 %v723, %v45
    %v805 = vmul.f32 %v724, %v46
    %v806 = vmul.f32 %v725, %v47
    %v807 = vmul.f32 %v726, %v48
    %v808 = vmul.f32 %v727, %v49
    %v809 = vmul.f32 %v728, %v50
    %v810 = vmul.f32 %v729, %v51
    %v811 = vmul.f32 %v730, %v52
    %v812 = vmul.f32 %v731, %v53
    %v813 = vmul.f32 %v732, %v54
    %v814 = vmul.f32 %v733, %v55
    %v815 = vadd.f32 %v799, %v735
    %v816 = vadd.f32 %v800, %v736
    %v817 = vadd.f32 %v801, %v737
    %v818 = vadd.f32 %v802, %v738
    %v819 = vadd.f32 %v803, %v739
    %v820 = vadd.f32 %v804, %v740
    %v821 = vadd.f32 %v805, %v741
    %v822 = vadd.f32 %v806, %v742
    %v823 = vadd.f32 %v807, %v743
    %v824 = vadd.f32 %v808, %v744
    %v825 = vadd.f32 %v809, %v745
    %v826 = vadd.f32 %v810, %v746
    %v827 = vadd.f32 %v811, %v747
    %v828 = vadd.f32 %v812, %v748
    %v829 = vadd.f32 %v813, %v749
    %v830 = vadd.f32 %v814, %v750
    %v831 = vmul.f32 %v815, 0.5
    %v832 = vmul.f32 %v816, 0.5
    %v833 = vmul.f32 %v817, 0.5
    %v834 = vmul.f32 %v818, 0.5
    %v835 = vmul.f32 %v819, 0.5
    %v836 = vmul.f32 %v820, 0.5
    %v837 = vmul.f32 %v821, 0.5
    %v838 = vmul.f32 %v822, 0.5
    %v839 = vmul.f32 %v823, 0.5
    %v840 = vmul.f32 %v824, 0.5
    %v841 = vmul.f32 %v825, 0.5
    %v842 = vmul.f32 %v826, 0.5
    %v843 = vmul.f32 %v827, 0.5
    %v844 = vmul.f32 %v828, 0.5
    %v845 = vmul.f32 %v829, 0.5
    %v846 = vmul.f32 %v830, 0.5
    %v847 = vtanh.pop %v831
    %v848 = vtanh.pop %v832
    %v849 = vtanh.pop %v833
    %v850 = vtanh.pop %v834
    %v851 = vtanh.pop %v835
    %v852 = vtanh.pop %v836
    %v853 = vtanh.pop %v837
    %v854 = vtanh.pop %v838
    %v855 = vtanh.pop %v839
    %v856 = vtanh.pop %v840
    %v857 = vtanh.pop %v841
    %v858 = vtanh.pop %v842
    %v859 = vtanh.pop %v843
    %v860 = vtanh.pop %v844
    %v861 = vtanh.pop %v845
    %v862 = vtanh.pop %v846
    %v863 = vadd.f32 %v847, 1.0
    %v864 = vadd.f32 %v848, 1.0
    %v865 = vadd.f32 %v849, 1.0
    %v866 = vadd.f32 %v850, 1.0
    %v867 = vadd.f32 %v851, 1.0
    %v868 = vadd.f32 %v852, 1.0
    %v869 = vadd.f32 %v853, 1.0
    %v870 = vadd.f32 %v854, 1.0
    %v871 = vadd.f32 %v855, 1.0
    %v872 = vadd.f32 %v856, 1.0
    %v873 = vadd.f32 %v857, 1.0
    %v874 = vadd.f32 %v858, 1.0
    %v875 = vadd.f32 %v859, 1.0
    %v876 = vadd.f32 %v860, 1.0
    %v877 = vadd.f32 %v861, 1.0
    %v878 = vadd.f32 %v862, 1.0
    %v879 = vmul.f32 %v863, 0.5
    %v880 = vmul.f32 %v864, 0.5
    %v881 = vmul.f32 %v865, 0.5
    %v882 = vmul.f32 %v866, 0.5
    %v883 = vmul.f32 %v867, 0.5
    %v884 = vmul.f32 %v868, 0.5
    %v885 = vmul.f32 %v869, 0.5
    %v886 = vmul.f32 %v870, 0.5
    %v887 = vmul.f32 %v871, 0.5
    %v888 = vmul.f32 %v872, 0.5
    %v889 = vmul.f32 %v873, 0.5
    %v890 = vmul.f32 %v874, 0.5
    %v891 = vmul.f32 %v875, 0.5
    %v892 = vmul.f32 %v876, 0.5
    %v893 = vmul.f32 %v877, 0.5
    %v894 = vmul.f32 %v878, 0.5
    %v895 = vmul.f32 %v768, %v879
    %v896 = vmul.f32 %v770, %v880
    %v897 = vmul.f32 %v772, %v881
    %v898 = vmul.f32 %v774, %v882
    %v899 = vmul.f32 %v776, %v883
    %v900 = vmul.f32 %v778, %v884
    %v901 = vmul.f32 %v780, %v885
    %v902 = vmul.f32 %v782, %v886
    %v903 = vmul.f32 %v784, %v887
    %v904 = vmul.f32 %v786, %v888
    %v905 = vmul.f32 %v788, %v889
    %v906 = vmul.f32 %v790, %v890
    %v907 = vmul.f32 %v792, %v891
    %v908 = vmul.f32 %v794, %v892
    %v909 = vmul.f32 %v796, %v893
    %v910 = vmul.f32 %v798, %v894
    %v911 = vadd.f32 %v525, %v895
    %v912 = vadd.f32 %v526, %v896
    %v913 = vadd.f32 %v527, %v897
    %v914 = vadd.f32 %v528, %v898
    %v915 = vadd.f32 %v529, %v899
    %v916 = vadd.f32 %v530, %v900
    %v917 = vadd.f32 %v531, %v901
    %v918 = vadd.f32 %v532, %v902
    %v919 = vadd.f32 %v533, %v903
    %v920 = vadd.f32 %v534, %v904
    %v921 = vadd.f32 %v535, %v905
    %v922 = vadd.f32 %v536, %v906
    %v923 = vadd.f32 %v537, %v907
    %v924 = vadd.f32 %v538, %v908
    %v925 = vadd.f32 %v539, %v909
    %v926 = vadd.f32 %v540, %v910
    %v927 = vadd.f32 %v541, %v768
    %v928 = vadd.f32 %v542, %v770
    %v929 = vadd.f32 %v543, %v772
    %v930 = vadd.f32 %v544, %v774
    %v931 = vadd.f32 %v545, %v776
    %v932 = vadd.f32 %v546, %v778
    %v933 = vadd.f32 %v547, %v780
    %v934 = vadd.f32 %v548, %v782
    %v935 = vadd.f32 %v549, %v784
    %v936 = vadd.f32 %v550, %v786
    %v937 = vadd.f32 %v551, %v788
    %v938 = vadd.f32 %v552, %v790
    %v939 = vadd.f32 %v553, %v792
    %v940 = vadd.f32 %v554, %v794
    %v941 = vadd.f32 %v555, %v796
    %v942 = vadd.f32 %v556, %v798
    %s943 = scalar_lea.vmem [#allocation5], 256
    %v944 = vld [vmem:[%s943] sm:$0xff]
    %v945 = vld [vmem:[%s943 + $0x8] sm:$0xff]
    %v946 = vld [vmem:[%s943 + $0x10] sm:$0xff]
    %v947 = vld [vmem:[%s943 + $0x18] sm:$0xff]
    %v948 = vld [vmem:[%s943 + $0x20] sm:$0xff]
    %v949 = vld [vmem:[%s943 + $0x28] sm:$0xff]
    %v950 = vld [vmem:[%s943 + $0x30] sm:$0xff]
    %v951 = vld [vmem:[%s943 + $0x38] sm:$0xff]
    %v952 = vld [vmem:[%s943 + $0x40] sm:$0xff]
    %v953 = vld [vmem:[%s943 + $0x48] sm:$0xff]
    %v954 = vld [vmem:[%s943 + $0x50] sm:$0xff]
    %v955 = vld [vmem:[%s943 + $0x58] sm:$0xff]
    %v956 = vld [vmem:[%s943 + $0x60] sm:$0xff]
    %v957 = vld [vmem:[%s943 + $0x68] sm:$0xff]
    %v958 = vld [vmem:[%s943 + $0x70] sm:$0xff]
    %v959 = vld [vmem:[%s943 + $0x78] sm:$0xff]
    %v960 = vmax.f32 %v944, 0.0
    %v961 = vmax.f32 %v945, 0.0
    %v962 = vmax.f32 %v946, 0.0
    %v963 = vmax.f32 %v947, 0.0
    %v964 = vmax.f32 %v948, 0.0
    %v965 = vmax.f32 %v949, 0.0
    %v966 = vmax.f32 %v950, 0.0
    %v967 = vmax.f32 %v951, 0.0
    %v968 = vmax.f32 %v952, 0.0
    %v969 = vmax.f32 %v953, 0.0
    %v970 = vmax.f32 %v954, 0.0
    %v971 = vmax.f32 %v955, 0.0
    %v972 = vmax.f32 %v956, 0.0
    %v973 = vmax.f32 %v957, 0.0
    %v974 = vmax.f32 %v958, 0.0
    %v975 = vmax.f32 %v959, 0.0
    %v976 = vand.u32 2147483647, %v944
    %v977 = vand.u32 2147483647, %v945
    %v978 = vand.u32 2147483647, %v946
    %v979 = vand.u32 2147483647, %v947
    %v980 = vand.u32 2147483647, %v948
    %v981 = vand.u32 2147483647, %v949
    %v982 = vand.u32 2147483647, %v950
    %v983 = vand.u32 2147483647, %v951
    %v984 = vand.u32 2147483647, %v952
    %v985 = vand.u32 2147483647, %v953
    %v986 = vand.u32 2147483647, %v954
    %v987 = vand.u32 2147483647, %v955
    %v988 = vand.u32 2147483647, %v956
    %v989 = vand.u32 2147483647, %v957
    %v990 = vand.u32 2147483647, %v958
    %v991 = vand.u32 2147483647, %v959
    %v992 = vsub.f32 0.0, %v976
    %v993 = vsub.f32 0.0, %v977
    %v994 = vsub.f32 0.0, %v978
    %v995 = vsub.f32 0.0, %v979
    %v996 = vsub.f32 0.0, %v980
    %v997 = vsub.f32 0.0, %v981
    %v998 = vsub.f32 0.0, %v982
    %v999 = vsub.f32 0.0, %v983
    %v1000 = vsub.f32 0.0, %v984
    %v1001 = vsub.f32 0.0, %v985
    %v1002 = vsub.f32 0.0, %v986
    %v1003 = vsub.f32 0.0, %v987
    %v1004 = vsub.f32 0.0, %v988
    %v1005 = vsub.f32 0.0, %v989
    %v1006 = vsub.f32 0.0, %v990
    %v1007 = vsub.f32 0.0, %v991
    %v1008 = vmul.f32 %v992, 1.442695
    %v1009 = vpow.pop %v1008
    %v1010 = vmul.f32 %v993, 1.442695
    %v1011 = vpow.pop %v1010
    %v1012 = vmul.f32 %v994, 1.442695
    %v1013 = vpow.pop %v1012
    %v1014 = vmul.f32 %v995, 1.442695
    %v1015 = vpow.pop %v1014
    %v1016 = vmul.f32 %v996, 1.442695
    %v1017 = vpow.pop %v1016
    %v1018 = vmul.f32 %v997, 1.442695
    %v1019 = vpow.pop %v1018
    %v1020 = vmul.f32 %v998, 1.442695
    %v1021 = vpow.pop %v1020
    %v1022 = vmul.f32 %v999, 1.442695
    %v1023 = vpow.pop %v1022
    %v1024 = vmul.f32 %v1000, 1.442695
    %v1025 = vpow.pop %v1024
    %v1026 = vmul.f32 %v1001, 1.442695
    %v1027 = vpow.pop %v1026
    %v1028 = vmul.f32 %v1002, 1.442695
    %v1029 = vpow.pop %v1028
    %v1030 = vmul.f32 %v1003, 1.442695
    %v1031 = vpow.pop %v1030
    %v1032 = vmul.f32 %v1004, 1.442695
    %v1033 = vpow.pop %v1032
    %v1034 = vmul.f32 %v1005, 1.442695
    %v1035 = vpow.pop %v1034
    %v1036 = vmul.f32 %v1006, 1.442695
    %v1037 = vpow.pop %v1036
    %v1038 = vmul.f32 %v1007, 1.442695
    %v1039 = vpow.pop %v1038
    %v1040 = vadd.f32 %v1009, 1.0
    %v1041 = vadd.f32 %v1011, 1.0
    %v1042 = vadd.f32 %v1013, 1.0
    %v1043 = vadd.f32 %v1015, 1.0
    %v1044 = vadd.f32 %v1017, 1.0
    %v1045 = vadd.f32 %v1019, 1.0
    %v1046 = vadd.f32 %v1021, 1.0
    %v1047 = vadd.f32 %v1023, 1.0
    %v1048 = vadd.f32 %v1025, 1.0
    %v1049 = vadd.f32 %v1027, 1.0
    %v1050 = vadd.f32 %v1029, 1.0
    %v1051 = vadd.f32 %v1031, 1.0
    %v1052 = vadd.f32 %v1033, 1.0
    %v1053 = vadd.f32 %v1035, 1.0
    %v1054 = vadd.f32 %v1037, 1.0
    %v1055 = vadd.f32 %v1039, 1.0
    %v1056 = vlog2.pop %v1040
    %v1057 = vmul.f32 %v1056, 0.6931472
    %v1058 = vlog2.pop %v1041
    %v1059 = vmul.f32 %v1058, 0.6931472
    %v1060 = vlog2.pop %v1042
    %v1061 = vmul.f32 %v1060, 0.6931472
    %v1062 = vlog2.pop %v1043
    %v1063 = vmul.f32 %v1062, 0.6931472
    %v1064 = vlog2.pop %v1044
    %v1065 = vmul.f32 %v1064, 0.6931472
    %v1066 = vlog2.pop %v1045
    %v1067 = vmul.f32 %v1066, 0.6931472
    %v1068 = vlog2.pop %v1046
    %v1069 = vmul.f32 %v1068, 0.6931472
    %v1070 = vlog2.pop %v1047
    %v1071 = vmul.f32 %v1070, 0.6931472
    %v1072 = vlog2.pop %v1048
    %v1073 = vmul.f32 %v1072, 0.6931472
    %v1074 = vlog2.pop %v1049
    %v1075 = vmul.f32 %v1074, 0.6931472
    %v1076 = vlog2.pop %v1050
    %v1077 = vmul.f32 %v1076, 0.6931472
    %v1078 = vlog2.pop %v1051
    %v1079 = vmul.f32 %v1078, 0.6931472
    %v1080 = vlog2.pop %v1052
    %v1081 = vmul.f32 %v1080, 0.6931472
    %v1082 = vlog2.pop %v1053
    %v1083 = vmul.f32 %v1082, 0.6931472
    %v1084 = vlog2.pop %v1054
    %v1085 = vmul.f32 %v1084, 0.6931472
    %v1086 = vlog2.pop %v1055
    %v1087 = vmul.f32 %v1086, 0.6931472
    %v1088 = vadd.f32 %v960, %v1057
    %v1089 = vadd.f32 %v961, %v1059
    %v1090 = vadd.f32 %v962, %v1061
    %v1091 = vadd.f32 %v963, %v1063
    %v1092 = vadd.f32 %v964, %v1065
    %v1093 = vadd.f32 %v965, %v1067
    %v1094 = vadd.f32 %v966, %v1069
    %v1095 = vadd.f32 %v967, %v1071
    %v1096 = vadd.f32 %v968, %v1073
    %v1097 = vadd.f32 %v969, %v1075
    %v1098 = vadd.f32 %v970, %v1077
    %v1099 = vadd.f32 %v971, %v1079
    %v1100 = vadd.f32 %v972, %v1081
    %v1101 = vadd.f32 %v973, %v1083
    %v1102 = vadd.f32 %v974, %v1085
    %v1103 = vadd.f32 %v975, %v1087
    %v1104 = vadd.f32 %v1088, 1e-06
    %v1105 = vadd.f32 %v1089, 1e-06
    %v1106 = vadd.f32 %v1090, 1e-06
    %v1107 = vadd.f32 %v1091, 1e-06
    %v1108 = vadd.f32 %v1092, 1e-06
    %v1109 = vadd.f32 %v1093, 1e-06
    %v1110 = vadd.f32 %v1094, 1e-06
    %v1111 = vadd.f32 %v1095, 1e-06
    %v1112 = vadd.f32 %v1096, 1e-06
    %v1113 = vadd.f32 %v1097, 1e-06
    %v1114 = vadd.f32 %v1098, 1e-06
    %v1115 = vadd.f32 %v1099, 1e-06
    %v1116 = vadd.f32 %v1100, 1e-06
    %v1117 = vadd.f32 %v1101, 1e-06
    %v1118 = vadd.f32 %v1102, 1e-06
    %v1119 = vadd.f32 %v1103, 1e-06
    %s1120 = scalar_lea.vmem [#allocation5], 768
    %v1121 = vld [vmem:[%s1120] sm:$0xff]
    %v1122 = vld [vmem:[%s1120 + $0x8] sm:$0xff]
    %v1123 = vld [vmem:[%s1120 + $0x10] sm:$0xff]
    %v1124 = vld [vmem:[%s1120 + $0x18] sm:$0xff]
    %v1125 = vld [vmem:[%s1120 + $0x20] sm:$0xff]
    %v1126 = vld [vmem:[%s1120 + $0x28] sm:$0xff]
    %v1127 = vld [vmem:[%s1120 + $0x30] sm:$0xff]
    %v1128 = vld [vmem:[%s1120 + $0x38] sm:$0xff]
    %v1129 = vld [vmem:[%s1120 + $0x40] sm:$0xff]
    %v1130 = vld [vmem:[%s1120 + $0x48] sm:$0xff]
    %v1131 = vld [vmem:[%s1120 + $0x50] sm:$0xff]
    %v1132 = vld [vmem:[%s1120 + $0x58] sm:$0xff]
    %v1133 = vld [vmem:[%s1120 + $0x60] sm:$0xff]
    %v1134 = vld [vmem:[%s1120 + $0x68] sm:$0xff]
    %v1135 = vld [vmem:[%s1120 + $0x70] sm:$0xff]
    %v1136 = vld [vmem:[%s1120 + $0x78] sm:$0xff]
    %v1137 = vsub.f32 %v107, %v156
    %v1138 = vsub.f32 %v108, %v157
    %v1139 = vsub.f32 %v109, %v158
    %v1140 = vsub.f32 %v110, %v159
    %v1141 = vsub.f32 %v111, %v160
    %v1142 = vsub.f32 %v112, %v161
    %v1143 = vsub.f32 %v113, %v162
    %v1144 = vsub.f32 %v114, %v163
    %v1145 = vsub.f32 %v115, %v164
    %v1146 = vsub.f32 %v116, %v165
    %v1147 = vsub.f32 %v117, %v166
    %v1148 = vsub.f32 %v118, %v167
    %v1149 = vsub.f32 %v119, %v168
    %v1150 = vsub.f32 %v120, %v169
    %v1151 = vsub.f32 %v121, %v170
    %v1152 = vsub.f32 %v122, %v171
    %v1153 = vmul.f32 %v1137, 1.442695
    %v1154 = vpow.pop %v1153
    %v1155 = vmul.f32 %v1138, 1.442695
    %v1156 = vpow.pop %v1155
    %v1157 = vmul.f32 %v1139, 1.442695
    %v1158 = vpow.pop %v1157
    %v1159 = vmul.f32 %v1140, 1.442695
    %v1160 = vpow.pop %v1159
    %v1161 = vmul.f32 %v1141, 1.442695
    %v1162 = vpow.pop %v1161
    %v1163 = vmul.f32 %v1142, 1.442695
    %v1164 = vpow.pop %v1163
    %v1165 = vmul.f32 %v1143, 1.442695
    %v1166 = vpow.pop %v1165
    %v1167 = vmul.f32 %v1144, 1.442695
    %v1168 = vpow.pop %v1167
    %v1169 = vmul.f32 %v1145, 1.442695
    %v1170 = vpow.pop %v1169
    %v1171 = vmul.f32 %v1146, 1.442695
    %v1172 = vpow.pop %v1171
    %v1173 = vmul.f32 %v1147, 1.442695
    %v1174 = vpow.pop %v1173
    %v1175 = vmul.f32 %v1148, 1.442695
    %v1176 = vpow.pop %v1175
    %v1177 = vmul.f32 %v1149, 1.442695
    %v1178 = vpow.pop %v1177
    %v1179 = vmul.f32 %v1150, 1.442695
    %v1180 = vpow.pop %v1179
    %v1181 = vmul.f32 %v1151, 1.442695
    %v1182 = vpow.pop %v1181
    %v1183 = vmul.f32 %v1152, 1.442695
    %v1184 = vpow.pop %v1183
    %v1185 = vmul.f32 %v1104, %v40
    %v1186 = vmul.f32 %v1105, %v41
    %v1187 = vmul.f32 %v1106, %v42
    %v1188 = vmul.f32 %v1107, %v43
    %v1189 = vmul.f32 %v1108, %v44
    %v1190 = vmul.f32 %v1109, %v45
    %v1191 = vmul.f32 %v1110, %v46
    %v1192 = vmul.f32 %v1111, %v47
    %v1193 = vmul.f32 %v1112, %v48
    %v1194 = vmul.f32 %v1113, %v49
    %v1195 = vmul.f32 %v1114, %v50
    %v1196 = vmul.f32 %v1115, %v51
    %v1197 = vmul.f32 %v1116, %v52
    %v1198 = vmul.f32 %v1117, %v53
    %v1199 = vmul.f32 %v1118, %v54
    %v1200 = vmul.f32 %v1119, %v55
    %v1201 = vadd.f32 %v1185, %v1121
    %v1202 = vadd.f32 %v1186, %v1122
    %v1203 = vadd.f32 %v1187, %v1123
    %v1204 = vadd.f32 %v1188, %v1124
    %v1205 = vadd.f32 %v1189, %v1125
    %v1206 = vadd.f32 %v1190, %v1126
    %v1207 = vadd.f32 %v1191, %v1127
    %v1208 = vadd.f32 %v1192, %v1128
    %v1209 = vadd.f32 %v1193, %v1129
    %v1210 = vadd.f32 %v1194, %v1130
    %v1211 = vadd.f32 %v1195, %v1131
    %v1212 = vadd.f32 %v1196, %v1132
    %v1213 = vadd.f32 %v1197, %v1133
    %v1214 = vadd.f32 %v1198, %v1134
    %v1215 = vadd.f32 %v1199, %v1135
    %v1216 = vadd.f32 %v1200, %v1136
    %v1217 = vmul.f32 %v1201, 0.5
    %v1218 = vmul.f32 %v1202, 0.5
    %v1219 = vmul.f32 %v1203, 0.5
    %v1220 = vmul.f32 %v1204, 0.5
    %v1221 = vmul.f32 %v1205, 0.5
    %v1222 = vmul.f32 %v1206, 0.5
    %v1223 = vmul.f32 %v1207, 0.5
    %v1224 = vmul.f32 %v1208, 0.5
    %v1225 = vmul.f32 %v1209, 0.5
    %v1226 = vmul.f32 %v1210, 0.5
    %v1227 = vmul.f32 %v1211, 0.5
    %v1228 = vmul.f32 %v1212, 0.5
    %v1229 = vmul.f32 %v1213, 0.5
    %v1230 = vmul.f32 %v1214, 0.5
    %v1231 = vmul.f32 %v1215, 0.5
    %v1232 = vmul.f32 %v1216, 0.5
    %v1233 = vtanh.pop %v1217
    %v1234 = vtanh.pop %v1218
    %v1235 = vtanh.pop %v1219
    %v1236 = vtanh.pop %v1220
    %v1237 = vtanh.pop %v1221
    %v1238 = vtanh.pop %v1222
    %v1239 = vtanh.pop %v1223
    %v1240 = vtanh.pop %v1224
    %v1241 = vtanh.pop %v1225
    %v1242 = vtanh.pop %v1226
    %v1243 = vtanh.pop %v1227
    %v1244 = vtanh.pop %v1228
    %v1245 = vtanh.pop %v1229
    %v1246 = vtanh.pop %v1230
    %v1247 = vtanh.pop %v1231
    %v1248 = vtanh.pop %v1232
    %v1249 = vadd.f32 %v1233, 1.0
    %v1250 = vadd.f32 %v1234, 1.0
    %v1251 = vadd.f32 %v1235, 1.0
    %v1252 = vadd.f32 %v1236, 1.0
    %v1253 = vadd.f32 %v1237, 1.0
    %v1254 = vadd.f32 %v1238, 1.0
    %v1255 = vadd.f32 %v1239, 1.0
    %v1256 = vadd.f32 %v1240, 1.0
    %v1257 = vadd.f32 %v1241, 1.0
    %v1258 = vadd.f32 %v1242, 1.0
    %v1259 = vadd.f32 %v1243, 1.0
    %v1260 = vadd.f32 %v1244, 1.0
    %v1261 = vadd.f32 %v1245, 1.0
    %v1262 = vadd.f32 %v1246, 1.0
    %v1263 = vadd.f32 %v1247, 1.0
    %v1264 = vadd.f32 %v1248, 1.0
    %v1265 = vmul.f32 %v1249, 0.5
    %v1266 = vmul.f32 %v1250, 0.5
    %v1267 = vmul.f32 %v1251, 0.5
    %v1268 = vmul.f32 %v1252, 0.5
    %v1269 = vmul.f32 %v1253, 0.5
    %v1270 = vmul.f32 %v1254, 0.5
    %v1271 = vmul.f32 %v1255, 0.5
    %v1272 = vmul.f32 %v1256, 0.5
    %v1273 = vmul.f32 %v1257, 0.5
    %v1274 = vmul.f32 %v1258, 0.5
    %v1275 = vmul.f32 %v1259, 0.5
    %v1276 = vmul.f32 %v1260, 0.5
    %v1277 = vmul.f32 %v1261, 0.5
    %v1278 = vmul.f32 %v1262, 0.5
    %v1279 = vmul.f32 %v1263, 0.5
    %v1280 = vmul.f32 %v1264, 0.5
    %v1281 = vmul.f32 %v1154, %v1265
    %v1282 = vmul.f32 %v1156, %v1266
    %v1283 = vmul.f32 %v1158, %v1267
    %v1284 = vmul.f32 %v1160, %v1268
    %v1285 = vmul.f32 %v1162, %v1269
    %v1286 = vmul.f32 %v1164, %v1270
    %v1287 = vmul.f32 %v1166, %v1271
    %v1288 = vmul.f32 %v1168, %v1272
    %v1289 = vmul.f32 %v1170, %v1273
    %v1290 = vmul.f32 %v1172, %v1274
    %v1291 = vmul.f32 %v1174, %v1275
    %v1292 = vmul.f32 %v1176, %v1276
    %v1293 = vmul.f32 %v1178, %v1277
    %v1294 = vmul.f32 %v1180, %v1278
    %v1295 = vmul.f32 %v1182, %v1279
    %v1296 = vmul.f32 %v1184, %v1280
    %v1297 = vadd.f32 %v911, %v1281
    %v1298 = vadd.f32 %v912, %v1282
    %v1299 = vadd.f32 %v913, %v1283
    %v1300 = vadd.f32 %v914, %v1284
    %v1301 = vadd.f32 %v915, %v1285
    %v1302 = vadd.f32 %v916, %v1286
    %v1303 = vadd.f32 %v917, %v1287
    %v1304 = vadd.f32 %v918, %v1288
    %v1305 = vadd.f32 %v919, %v1289
    %v1306 = vadd.f32 %v920, %v1290
    %v1307 = vadd.f32 %v921, %v1291
    %v1308 = vadd.f32 %v922, %v1292
    %v1309 = vadd.f32 %v923, %v1293
    %v1310 = vadd.f32 %v924, %v1294
    %v1311 = vadd.f32 %v925, %v1295
    %v1312 = vadd.f32 %v926, %v1296
    %v1313 = vadd.f32 %v927, %v1154
    %v1314 = vadd.f32 %v928, %v1156
    %v1315 = vadd.f32 %v929, %v1158
    %v1316 = vadd.f32 %v930, %v1160
    %v1317 = vadd.f32 %v931, %v1162
    %v1318 = vadd.f32 %v932, %v1164
    %v1319 = vadd.f32 %v933, %v1166
    %v1320 = vadd.f32 %v934, %v1168
    %v1321 = vadd.f32 %v935, %v1170
    %v1322 = vadd.f32 %v936, %v1172
    %v1323 = vadd.f32 %v937, %v1174
    %v1324 = vadd.f32 %v938, %v1176
    %v1325 = vadd.f32 %v939, %v1178
    %v1326 = vadd.f32 %v940, %v1180
    %v1327 = vadd.f32 %v941, %v1182
    %v1328 = vadd.f32 %v942, %v1184
    %s1329 = scalar_lea.vmem [#allocation5], 384
    %v1330 = vld [vmem:[%s1329] sm:$0xff]
    %v1331 = vld [vmem:[%s1329 + $0x8] sm:$0xff]
    %v1332 = vld [vmem:[%s1329 + $0x10] sm:$0xff]
    %v1333 = vld [vmem:[%s1329 + $0x18] sm:$0xff]
    %v1334 = vld [vmem:[%s1329 + $0x20] sm:$0xff]
    %v1335 = vld [vmem:[%s1329 + $0x28] sm:$0xff]
    %v1336 = vld [vmem:[%s1329 + $0x30] sm:$0xff]
    %v1337 = vld [vmem:[%s1329 + $0x38] sm:$0xff]
    %v1338 = vld [vmem:[%s1329 + $0x40] sm:$0xff]
    %v1339 = vld [vmem:[%s1329 + $0x48] sm:$0xff]
    %v1340 = vld [vmem:[%s1329 + $0x50] sm:$0xff]
    %v1341 = vld [vmem:[%s1329 + $0x58] sm:$0xff]
    %v1342 = vld [vmem:[%s1329 + $0x60] sm:$0xff]
    %v1343 = vld [vmem:[%s1329 + $0x68] sm:$0xff]
    %v1344 = vld [vmem:[%s1329 + $0x70] sm:$0xff]
    %v1345 = vld [vmem:[%s1329 + $0x78] sm:$0xff]
    %v1346 = vmax.f32 %v1330, 0.0
    %v1347 = vmax.f32 %v1331, 0.0
    %v1348 = vmax.f32 %v1332, 0.0
    %v1349 = vmax.f32 %v1333, 0.0
    %v1350 = vmax.f32 %v1334, 0.0
    %v1351 = vmax.f32 %v1335, 0.0
    %v1352 = vmax.f32 %v1336, 0.0
    %v1353 = vmax.f32 %v1337, 0.0
    %v1354 = vmax.f32 %v1338, 0.0
    %v1355 = vmax.f32 %v1339, 0.0
    %v1356 = vmax.f32 %v1340, 0.0
    %v1357 = vmax.f32 %v1341, 0.0
    %v1358 = vmax.f32 %v1342, 0.0
    %v1359 = vmax.f32 %v1343, 0.0
    %v1360 = vmax.f32 %v1344, 0.0
    %v1361 = vmax.f32 %v1345, 0.0
    %v1362 = vand.u32 2147483647, %v1330
    %v1363 = vand.u32 2147483647, %v1331
    %v1364 = vand.u32 2147483647, %v1332
    %v1365 = vand.u32 2147483647, %v1333
    %v1366 = vand.u32 2147483647, %v1334
    %v1367 = vand.u32 2147483647, %v1335
    %v1368 = vand.u32 2147483647, %v1336
    %v1369 = vand.u32 2147483647, %v1337
    %v1370 = vand.u32 2147483647, %v1338
    %v1371 = vand.u32 2147483647, %v1339
    %v1372 = vand.u32 2147483647, %v1340
    %v1373 = vand.u32 2147483647, %v1341
    %v1374 = vand.u32 2147483647, %v1342
    %v1375 = vand.u32 2147483647, %v1343
    %v1376 = vand.u32 2147483647, %v1344
    %v1377 = vand.u32 2147483647, %v1345
    %v1378 = vsub.f32 0.0, %v1362
    %v1379 = vsub.f32 0.0, %v1363
    %v1380 = vsub.f32 0.0, %v1364
    %v1381 = vsub.f32 0.0, %v1365
    %v1382 = vsub.f32 0.0, %v1366
    %v1383 = vsub.f32 0.0, %v1367
    %v1384 = vsub.f32 0.0, %v1368
    %v1385 = vsub.f32 0.0, %v1369
    %v1386 = vsub.f32 0.0, %v1370
    %v1387 = vsub.f32 0.0, %v1371
    %v1388 = vsub.f32 0.0, %v1372
    %v1389 = vsub.f32 0.0, %v1373
    %v1390 = vsub.f32 0.0, %v1374
    %v1391 = vsub.f32 0.0, %v1375
    %v1392 = vsub.f32 0.0, %v1376
    %v1393 = vsub.f32 0.0, %v1377
    %v1394 = vmul.f32 %v1378, 1.442695
    %v1395 = vpow.pop %v1394
    %v1396 = vmul.f32 %v1379, 1.442695
    %v1397 = vpow.pop %v1396
    %v1398 = vmul.f32 %v1380, 1.442695
    %v1399 = vpow.pop %v1398
    %v1400 = vmul.f32 %v1381, 1.442695
    %v1401 = vpow.pop %v1400
    %v1402 = vmul.f32 %v1382, 1.442695
    %v1403 = vpow.pop %v1402
    %v1404 = vmul.f32 %v1383, 1.442695
    %v1405 = vpow.pop %v1404
    %v1406 = vmul.f32 %v1384, 1.442695
    %v1407 = vpow.pop %v1406
    %v1408 = vmul.f32 %v1385, 1.442695
    %v1409 = vpow.pop %v1408
    %v1410 = vmul.f32 %v1386, 1.442695
    %v1411 = vpow.pop %v1410
    %v1412 = vmul.f32 %v1387, 1.442695
    %v1413 = vpow.pop %v1412
    %v1414 = vmul.f32 %v1388, 1.442695
    %v1415 = vpow.pop %v1414
    %v1416 = vmul.f32 %v1389, 1.442695
    %v1417 = vpow.pop %v1416
    %v1418 = vmul.f32 %v1390, 1.442695
    %v1419 = vpow.pop %v1418
    %v1420 = vmul.f32 %v1391, 1.442695
    %v1421 = vpow.pop %v1420
    %v1422 = vmul.f32 %v1392, 1.442695
    %v1423 = vpow.pop %v1422
    %v1424 = vmul.f32 %v1393, 1.442695
    %v1425 = vpow.pop %v1424
    %v1426 = vadd.f32 %v1395, 1.0
    %v1427 = vadd.f32 %v1397, 1.0
    %v1428 = vadd.f32 %v1399, 1.0
    %v1429 = vadd.f32 %v1401, 1.0
    %v1430 = vadd.f32 %v1403, 1.0
    %v1431 = vadd.f32 %v1405, 1.0
    %v1432 = vadd.f32 %v1407, 1.0
    %v1433 = vadd.f32 %v1409, 1.0
    %v1434 = vadd.f32 %v1411, 1.0
    %v1435 = vadd.f32 %v1413, 1.0
    %v1436 = vadd.f32 %v1415, 1.0
    %v1437 = vadd.f32 %v1417, 1.0
    %v1438 = vadd.f32 %v1419, 1.0
    %v1439 = vadd.f32 %v1421, 1.0
    %v1440 = vadd.f32 %v1423, 1.0
    %v1441 = vadd.f32 %v1425, 1.0
    %v1442 = vlog2.pop %v1426
    %v1443 = vmul.f32 %v1442, 0.6931472
    %v1444 = vlog2.pop %v1427
    %v1445 = vmul.f32 %v1444, 0.6931472
    %v1446 = vlog2.pop %v1428
    %v1447 = vmul.f32 %v1446, 0.6931472
    %v1448 = vlog2.pop %v1429
    %v1449 = vmul.f32 %v1448, 0.6931472
    %v1450 = vlog2.pop %v1430
    %v1451 = vmul.f32 %v1450, 0.6931472
    %v1452 = vlog2.pop %v1431
    %v1453 = vmul.f32 %v1452, 0.6931472
    %v1454 = vlog2.pop %v1432
    %v1455 = vmul.f32 %v1454, 0.6931472
    %v1456 = vlog2.pop %v1433
    %v1457 = vmul.f32 %v1456, 0.6931472
    %v1458 = vlog2.pop %v1434
    %v1459 = vmul.f32 %v1458, 0.6931472
    %v1460 = vlog2.pop %v1435
    %v1461 = vmul.f32 %v1460, 0.6931472
    %v1462 = vlog2.pop %v1436
    %v1463 = vmul.f32 %v1462, 0.6931472
    %v1464 = vlog2.pop %v1437
    %v1465 = vmul.f32 %v1464, 0.6931472
    %v1466 = vlog2.pop %v1438
    %v1467 = vmul.f32 %v1466, 0.6931472
    %v1468 = vlog2.pop %v1439
    %v1469 = vmul.f32 %v1468, 0.6931472
    %v1470 = vlog2.pop %v1440
    %v1471 = vmul.f32 %v1470, 0.6931472
    %v1472 = vlog2.pop %v1441
    %v1473 = vmul.f32 %v1472, 0.6931472
    %v1474 = vadd.f32 %v1346, %v1443
    %v1475 = vadd.f32 %v1347, %v1445
    %v1476 = vadd.f32 %v1348, %v1447
    %v1477 = vadd.f32 %v1349, %v1449
    %v1478 = vadd.f32 %v1350, %v1451
    %v1479 = vadd.f32 %v1351, %v1453
    %v1480 = vadd.f32 %v1352, %v1455
    %v1481 = vadd.f32 %v1353, %v1457
    %v1482 = vadd.f32 %v1354, %v1459
    %v1483 = vadd.f32 %v1355, %v1461
    %v1484 = vadd.f32 %v1356, %v1463
    %v1485 = vadd.f32 %v1357, %v1465
    %v1486 = vadd.f32 %v1358, %v1467
    %v1487 = vadd.f32 %v1359, %v1469
    %v1488 = vadd.f32 %v1360, %v1471
    %v1489 = vadd.f32 %v1361, %v1473
    %v1490 = vadd.f32 %v1474, 1e-06
    %v1491 = vadd.f32 %v1475, 1e-06
    %v1492 = vadd.f32 %v1476, 1e-06
    %v1493 = vadd.f32 %v1477, 1e-06
    %v1494 = vadd.f32 %v1478, 1e-06
    %v1495 = vadd.f32 %v1479, 1e-06
    %v1496 = vadd.f32 %v1480, 1e-06
    %v1497 = vadd.f32 %v1481, 1e-06
    %v1498 = vadd.f32 %v1482, 1e-06
    %v1499 = vadd.f32 %v1483, 1e-06
    %v1500 = vadd.f32 %v1484, 1e-06
    %v1501 = vadd.f32 %v1485, 1e-06
    %v1502 = vadd.f32 %v1486, 1e-06
    %v1503 = vadd.f32 %v1487, 1e-06
    %v1504 = vadd.f32 %v1488, 1e-06
    %v1505 = vadd.f32 %v1489, 1e-06
    %s1506 = scalar_lea.vmem [#allocation5], 896
    %v1507 = vld [vmem:[%s1506] sm:$0xff]
    %v1508 = vld [vmem:[%s1506 + $0x8] sm:$0xff]
    %v1509 = vld [vmem:[%s1506 + $0x10] sm:$0xff]
    %v1510 = vld [vmem:[%s1506 + $0x18] sm:$0xff]
    %v1511 = vld [vmem:[%s1506 + $0x20] sm:$0xff]
    %v1512 = vld [vmem:[%s1506 + $0x28] sm:$0xff]
    %v1513 = vld [vmem:[%s1506 + $0x30] sm:$0xff]
    %v1514 = vld [vmem:[%s1506 + $0x38] sm:$0xff]
    %v1515 = vld [vmem:[%s1506 + $0x40] sm:$0xff]
    %v1516 = vld [vmem:[%s1506 + $0x48] sm:$0xff]
    %v1517 = vld [vmem:[%s1506 + $0x50] sm:$0xff]
    %v1518 = vld [vmem:[%s1506 + $0x58] sm:$0xff]
    %v1519 = vld [vmem:[%s1506 + $0x60] sm:$0xff]
    %v1520 = vld [vmem:[%s1506 + $0x68] sm:$0xff]
    %v1521 = vld [vmem:[%s1506 + $0x70] sm:$0xff]
    %v1522 = vld [vmem:[%s1506 + $0x78] sm:$0xff]
    %v1523 = vsub.f32 %v140, %v156
    %v1524 = vsub.f32 %v141, %v157
    %v1525 = vsub.f32 %v142, %v158
    %v1526 = vsub.f32 %v143, %v159
    %v1527 = vsub.f32 %v144, %v160
    %v1528 = vsub.f32 %v145, %v161
    %v1529 = vsub.f32 %v146, %v162
    %v1530 = vsub.f32 %v147, %v163
    %v1531 = vsub.f32 %v148, %v164
    %v1532 = vsub.f32 %v149, %v165
    %v1533 = vsub.f32 %v150, %v166
    %v1534 = vsub.f32 %v151, %v167
    %v1535 = vsub.f32 %v152, %v168
    %v1536 = vsub.f32 %v153, %v169
    %v1537 = vsub.f32 %v154, %v170
    %v1538 = vsub.f32 %v155, %v171
    %v1539 = vmul.f32 %v1523, 1.442695
    %v1540 = vpow.pop %v1539
    %v1541 = vmul.f32 %v1524, 1.442695
    %v1542 = vpow.pop %v1541
    %v1543 = vmul.f32 %v1525, 1.442695
    %v1544 = vpow.pop %v1543
    %v1545 = vmul.f32 %v1526, 1.442695
    %v1546 = vpow.pop %v1545
    %v1547 = vmul.f32 %v1527, 1.442695
    %v1548 = vpow.pop %v1547
    %v1549 = vmul.f32 %v1528, 1.442695
    %v1550 = vpow.pop %v1549
    %v1551 = vmul.f32 %v1529, 1.442695
    %v1552 = vpow.pop %v1551
    %v1553 = vmul.f32 %v1530, 1.442695
    %v1554 = vpow.pop %v1553
    %v1555 = vmul.f32 %v1531, 1.442695
    %v1556 = vpow.pop %v1555
    %v1557 = vmul.f32 %v1532, 1.442695
    %v1558 = vpow.pop %v1557
    %v1559 = vmul.f32 %v1533, 1.442695
    %v1560 = vpow.pop %v1559
    %v1561 = vmul.f32 %v1534, 1.442695
    %v1562 = vpow.pop %v1561
    %v1563 = vmul.f32 %v1535, 1.442695
    %v1564 = vpow.pop %v1563
    %v1565 = vmul.f32 %v1536, 1.442695
    %v1566 = vpow.pop %v1565
    %v1567 = vmul.f32 %v1537, 1.442695
    %v1568 = vpow.pop %v1567
    %v1569 = vmul.f32 %v1538, 1.442695
    %v1570 = vpow.pop %v1569
    %v1571 = vmul.f32 %v1490, %v40
    %v1572 = vmul.f32 %v1491, %v41
    %v1573 = vmul.f32 %v1492, %v42
    %v1574 = vmul.f32 %v1493, %v43
    %v1575 = vmul.f32 %v1494, %v44
    %v1576 = vmul.f32 %v1495, %v45
    %v1577 = vmul.f32 %v1496, %v46
    %v1578 = vmul.f32 %v1497, %v47
    %v1579 = vmul.f32 %v1498, %v48
    %v1580 = vmul.f32 %v1499, %v49
    %v1581 = vmul.f32 %v1500, %v50
    %v1582 = vmul.f32 %v1501, %v51
    %v1583 = vmul.f32 %v1502, %v52
    %v1584 = vmul.f32 %v1503, %v53
    %v1585 = vmul.f32 %v1504, %v54
    %v1586 = vmul.f32 %v1505, %v55
    %v1587 = vadd.f32 %v1571, %v1507
    %v1588 = vadd.f32 %v1572, %v1508
    %v1589 = vadd.f32 %v1573, %v1509
    %v1590 = vadd.f32 %v1574, %v1510
    %v1591 = vadd.f32 %v1575, %v1511
    %v1592 = vadd.f32 %v1576, %v1512
    %v1593 = vadd.f32 %v1577, %v1513
    %v1594 = vadd.f32 %v1578, %v1514
    %v1595 = vadd.f32 %v1579, %v1515
    %v1596 = vadd.f32 %v1580, %v1516
    %v1597 = vadd.f32 %v1581, %v1517
    %v1598 = vadd.f32 %v1582, %v1518
    %v1599 = vadd.f32 %v1583, %v1519
    %v1600 = vadd.f32 %v1584, %v1520
    %v1601 = vadd.f32 %v1585, %v1521
    %v1602 = vadd.f32 %v1586, %v1522
    %v1603 = vmul.f32 %v1587, 0.5
    %v1604 = vmul.f32 %v1588, 0.5
    %v1605 = vmul.f32 %v1589, 0.5
    %v1606 = vmul.f32 %v1590, 0.5
    %v1607 = vmul.f32 %v1591, 0.5
    %v1608 = vmul.f32 %v1592, 0.5
    %v1609 = vmul.f32 %v1593, 0.5
    %v1610 = vmul.f32 %v1594, 0.5
    %v1611 = vmul.f32 %v1595, 0.5
    %v1612 = vmul.f32 %v1596, 0.5
    %v1613 = vmul.f32 %v1597, 0.5
    %v1614 = vmul.f32 %v1598, 0.5
    %v1615 = vmul.f32 %v1599, 0.5
    %v1616 = vmul.f32 %v1600, 0.5
    %v1617 = vmul.f32 %v1601, 0.5
    %v1618 = vmul.f32 %v1602, 0.5
    %v1619 = vtanh.pop %v1603
    %v1620 = vtanh.pop %v1604
    %v1621 = vtanh.pop %v1605
    %v1622 = vtanh.pop %v1606
    %v1623 = vtanh.pop %v1607
    %v1624 = vtanh.pop %v1608
    %v1625 = vtanh.pop %v1609
    %v1626 = vtanh.pop %v1610
    %v1627 = vtanh.pop %v1611
    %v1628 = vtanh.pop %v1612
    %v1629 = vtanh.pop %v1613
    %v1630 = vtanh.pop %v1614
    %v1631 = vtanh.pop %v1615
    %v1632 = vtanh.pop %v1616
    %v1633 = vtanh.pop %v1617
    %v1634 = vtanh.pop %v1618
    %v1635 = vadd.f32 %v1619, 1.0
    %v1636 = vadd.f32 %v1620, 1.0
    %v1637 = vadd.f32 %v1621, 1.0
    %v1638 = vadd.f32 %v1622, 1.0
    %v1639 = vadd.f32 %v1623, 1.0
    %v1640 = vadd.f32 %v1624, 1.0
    %v1641 = vadd.f32 %v1625, 1.0
    %v1642 = vadd.f32 %v1626, 1.0
    %v1643 = vadd.f32 %v1627, 1.0
    %v1644 = vadd.f32 %v1628, 1.0
    %v1645 = vadd.f32 %v1629, 1.0
    %v1646 = vadd.f32 %v1630, 1.0
    %v1647 = vadd.f32 %v1631, 1.0
    %v1648 = vadd.f32 %v1632, 1.0
    %v1649 = vadd.f32 %v1633, 1.0
    %v1650 = vadd.f32 %v1634, 1.0
    %v1651 = vmul.f32 %v1635, 0.5
    %v1652 = vmul.f32 %v1636, 0.5
    %v1653 = vmul.f32 %v1637, 0.5
    %v1654 = vmul.f32 %v1638, 0.5
    %v1655 = vmul.f32 %v1639, 0.5
    %v1656 = vmul.f32 %v1640, 0.5
    %v1657 = vmul.f32 %v1641, 0.5
    %v1658 = vmul.f32 %v1642, 0.5
    %v1659 = vmul.f32 %v1643, 0.5
    %v1660 = vmul.f32 %v1644, 0.5
    %v1661 = vmul.f32 %v1645, 0.5
    %v1662 = vmul.f32 %v1646, 0.5
    %v1663 = vmul.f32 %v1647, 0.5
    %v1664 = vmul.f32 %v1648, 0.5
    %v1665 = vmul.f32 %v1649, 0.5
    %v1666 = vmul.f32 %v1650, 0.5
    %v1667 = vmul.f32 %v1540, %v1651
    %v1668 = vmul.f32 %v1542, %v1652
    %v1669 = vmul.f32 %v1544, %v1653
    %v1670 = vmul.f32 %v1546, %v1654
    %v1671 = vmul.f32 %v1548, %v1655
    %v1672 = vmul.f32 %v1550, %v1656
    %v1673 = vmul.f32 %v1552, %v1657
    %v1674 = vmul.f32 %v1554, %v1658
    %v1675 = vmul.f32 %v1556, %v1659
    %v1676 = vmul.f32 %v1558, %v1660
    %v1677 = vmul.f32 %v1560, %v1661
    %v1678 = vmul.f32 %v1562, %v1662
    %v1679 = vmul.f32 %v1564, %v1663
    %v1680 = vmul.f32 %v1566, %v1664
    %v1681 = vmul.f32 %v1568, %v1665
    %v1682 = vmul.f32 %v1570, %v1666
    %v1683 = vadd.f32 %v1297, %v1667
    %v1684 = vadd.f32 %v1298, %v1668
    %v1685 = vadd.f32 %v1299, %v1669
    %v1686 = vadd.f32 %v1300, %v1670
    %v1687 = vadd.f32 %v1301, %v1671
    %v1688 = vadd.f32 %v1302, %v1672
    %v1689 = vadd.f32 %v1303, %v1673
    %v1690 = vadd.f32 %v1304, %v1674
    %v1691 = vadd.f32 %v1305, %v1675
    %v1692 = vadd.f32 %v1306, %v1676
    %v1693 = vadd.f32 %v1307, %v1677
    %v1694 = vadd.f32 %v1308, %v1678
    %v1695 = vadd.f32 %v1309, %v1679
    %v1696 = vadd.f32 %v1310, %v1680
    %v1697 = vadd.f32 %v1311, %v1681
    %v1698 = vadd.f32 %v1312, %v1682
    %v1699 = vadd.f32 %v1313, %v1540
    %v1700 = vadd.f32 %v1314, %v1542
    %v1701 = vadd.f32 %v1315, %v1544
    %v1702 = vadd.f32 %v1316, %v1546
    %v1703 = vadd.f32 %v1317, %v1548
    %v1704 = vadd.f32 %v1318, %v1550
    %v1705 = vadd.f32 %v1319, %v1552
    %v1706 = vadd.f32 %v1320, %v1554
    %v1707 = vadd.f32 %v1321, %v1556
    %v1708 = vadd.f32 %v1322, %v1558
    %v1709 = vadd.f32 %v1323, %v1560
    %v1710 = vadd.f32 %v1324, %v1562
    %v1711 = vadd.f32 %v1325, %v1564
    %v1712 = vadd.f32 %v1326, %v1566
    %v1713 = vadd.f32 %v1327, %v1568
    %v1714 = vadd.f32 %v1328, %v1570
    %v1715 = vrcp.pop %v1699
    %v1716 = vmul.f32 %v1683, %v1715
    %v1717 = vrcp.pop %v1700
    %v1718 = vmul.f32 %v1684, %v1717
    %v1719 = vrcp.pop %v1701
    %v1720 = vmul.f32 %v1685, %v1719
    %v1721 = vrcp.pop %v1702
    %v1722 = vmul.f32 %v1686, %v1721
    %v1723 = vrcp.pop %v1703
    %v1724 = vmul.f32 %v1687, %v1723
    %v1725 = vrcp.pop %v1704
    %v1726 = vmul.f32 %v1688, %v1725
    %v1727 = vrcp.pop %v1705
    %v1728 = vmul.f32 %v1689, %v1727
    %v1729 = vrcp.pop %v1706
    %v1730 = vmul.f32 %v1690, %v1729
    %v1731 = vrcp.pop %v1707
    %v1732 = vmul.f32 %v1691, %v1731
    %v1733 = vrcp.pop %v1708
    %v1734 = vmul.f32 %v1692, %v1733
    %v1735 = vrcp.pop %v1709
    %v1736 = vmul.f32 %v1693, %v1735
    %v1737 = vrcp.pop %v1710
    %v1738 = vmul.f32 %v1694, %v1737
    %v1739 = vrcp.pop %v1711
    %v1740 = vmul.f32 %v1695, %v1739
    %v1741 = vrcp.pop %v1712
    %v1742 = vmul.f32 %v1696, %v1741
    %v1743 = vrcp.pop %v1713
    %v1744 = vmul.f32 %v1697, %v1743
    %v1745 = vrcp.pop %v1714
    %v1746 = vmul.f32 %v1698, %v1745
    %v1747 = vmul.f32 %v1716, 0.999999
    %v1748 = vmul.f32 %v1718, 0.999999
    %v1749 = vmul.f32 %v1720, 0.999999
    %v1750 = vmul.f32 %v1722, 0.999999
    %v1751 = vmul.f32 %v1724, 0.999999
    %v1752 = vmul.f32 %v1726, 0.999999
    %v1753 = vmul.f32 %v1728, 0.999999
    %v1754 = vmul.f32 %v1730, 0.999999
    %v1755 = vmul.f32 %v1732, 0.999999
    %v1756 = vmul.f32 %v1734, 0.999999
    %v1757 = vmul.f32 %v1736, 0.999999
    %v1758 = vmul.f32 %v1738, 0.999999
    %v1759 = vmul.f32 %v1740, 0.999999
    %v1760 = vmul.f32 %v1742, 0.999999
    %v1761 = vmul.f32 %v1744, 0.999999
    %v1762 = vmul.f32 %v1746, 0.999999
    %v1763 = vadd.f32 %v1747, 5e-07
    %v1764 = vadd.f32 %v1748, 5e-07
    %v1765 = vadd.f32 %v1749, 5e-07
    %v1766 = vadd.f32 %v1750, 5e-07
    %v1767 = vadd.f32 %v1751, 5e-07
    %v1768 = vadd.f32 %v1752, 5e-07
    %v1769 = vadd.f32 %v1753, 5e-07
    %v1770 = vadd.f32 %v1754, 5e-07
    %v1771 = vadd.f32 %v1755, 5e-07
    %v1772 = vadd.f32 %v1756, 5e-07
    %v1773 = vadd.f32 %v1757, 5e-07
    %v1774 = vadd.f32 %v1758, 5e-07
    %v1775 = vadd.f32 %v1759, 5e-07
    %v1776 = vadd.f32 %v1760, 5e-07
    %v1777 = vadd.f32 %v1761, 5e-07
    %v1778 = vadd.f32 %v1762, 5e-07
    %v1779 = vlog2.pop %v1763
    %v1780 = vmul.f32 %v1779, 0.6931472
    %v1781 = vlog2.pop %v1764
    %v1782 = vmul.f32 %v1781, 0.6931472
    %v1783 = vlog2.pop %v1765
    %v1784 = vmul.f32 %v1783, 0.6931472
    %v1785 = vlog2.pop %v1766
    %v1786 = vmul.f32 %v1785, 0.6931472
    %v1787 = vlog2.pop %v1767
    %v1788 = vmul.f32 %v1787, 0.6931472
    %v1789 = vlog2.pop %v1768
    %v1790 = vmul.f32 %v1789, 0.6931472
    %v1791 = vlog2.pop %v1769
    %v1792 = vmul.f32 %v1791, 0.6931472
    %v1793 = vlog2.pop %v1770
    %v1794 = vmul.f32 %v1793, 0.6931472
    %v1795 = vlog2.pop %v1771
    %v1796 = vmul.f32 %v1795, 0.6931472
    %v1797 = vlog2.pop %v1772
    %v1798 = vmul.f32 %v1797, 0.6931472
    %v1799 = vlog2.pop %v1773
    %v1800 = vmul.f32 %v1799, 0.6931472
    %v1801 = vlog2.pop %v1774
    %v1802 = vmul.f32 %v1801, 0.6931472
    %v1803 = vlog2.pop %v1775
    %v1804 = vmul.f32 %v1803, 0.6931472
    %v1805 = vlog2.pop %v1776
    %v1806 = vmul.f32 %v1805, 0.6931472
    %v1807 = vlog2.pop %v1777
    %v1808 = vmul.f32 %v1807, 0.6931472
    %v1809 = vlog2.pop %v1778
    %v1810 = vmul.f32 %v1809, 0.6931472
    %v1811 = vsub.f32 1.0, %v1763
    %v1812 = vsub.f32 1.0, %v1764
    %v1813 = vsub.f32 1.0, %v1765
    %v1814 = vsub.f32 1.0, %v1766
    %v1815 = vsub.f32 1.0, %v1767
    %v1816 = vsub.f32 1.0, %v1768
    %v1817 = vsub.f32 1.0, %v1769
    %v1818 = vsub.f32 1.0, %v1770
    %v1819 = vsub.f32 1.0, %v1771
    %v1820 = vsub.f32 1.0, %v1772
    %v1821 = vsub.f32 1.0, %v1773
    %v1822 = vsub.f32 1.0, %v1774
    %v1823 = vsub.f32 1.0, %v1775
    %v1824 = vsub.f32 1.0, %v1776
    %v1825 = vsub.f32 1.0, %v1777
    %v1826 = vsub.f32 1.0, %v1778
    %v1827 = vlog2.pop %v1811
    %v1828 = vmul.f32 %v1827, 0.6931472
    %v1829 = vlog2.pop %v1812
    %v1830 = vmul.f32 %v1829, 0.6931472
    %v1831 = vlog2.pop %v1813
    %v1832 = vmul.f32 %v1831, 0.6931472
    %v1833 = vlog2.pop %v1814
    %v1834 = vmul.f32 %v1833, 0.6931472
    %v1835 = vlog2.pop %v1815
    %v1836 = vmul.f32 %v1835, 0.6931472
    %v1837 = vlog2.pop %v1816
    %v1838 = vmul.f32 %v1837, 0.6931472
    %v1839 = vlog2.pop %v1817
    %v1840 = vmul.f32 %v1839, 0.6931472
    %v1841 = vlog2.pop %v1818
    %v1842 = vmul.f32 %v1841, 0.6931472
    %v1843 = vlog2.pop %v1819
    %v1844 = vmul.f32 %v1843, 0.6931472
    %v1845 = vlog2.pop %v1820
    %v1846 = vmul.f32 %v1845, 0.6931472
    %v1847 = vlog2.pop %v1821
    %v1848 = vmul.f32 %v1847, 0.6931472
    %v1849 = vlog2.pop %v1822
    %v1850 = vmul.f32 %v1849, 0.6931472
    %v1851 = vlog2.pop %v1823
    %v1852 = vmul.f32 %v1851, 0.6931472
    %v1853 = vlog2.pop %v1824
    %v1854 = vmul.f32 %v1853, 0.6931472
    %v1855 = vlog2.pop %v1825
    %v1856 = vmul.f32 %v1855, 0.6931472
    %v1857 = vlog2.pop %v1826
    %v1858 = vmul.f32 %v1857, 0.6931472
    %v1859 = vsub.f32 %v1780, %v1828
    %v1860 = vsub.f32 %v1782, %v1830
    %v1861 = vsub.f32 %v1784, %v1832
    %v1862 = vsub.f32 %v1786, %v1834
    %v1863 = vsub.f32 %v1788, %v1836
    %v1864 = vsub.f32 %v1790, %v1838
    %v1865 = vsub.f32 %v1792, %v1840
    %v1866 = vsub.f32 %v1794, %v1842
    %v1867 = vsub.f32 %v1796, %v1844
    %v1868 = vsub.f32 %v1798, %v1846
    %v1869 = vsub.f32 %v1800, %v1848
    %v1870 = vsub.f32 %v1802, %v1850
    %v1871 = vsub.f32 %v1804, %v1852
    %v1872 = vsub.f32 %v1806, %v1854
    %v1873 = vsub.f32 %v1808, %v1856
    %v1874 = vsub.f32 %v1810, %v1858
    %1875 = vst [vmem:[#allocation7] sm:$0xff] %v1859
    %1876 = vst [vmem:[#allocation7 + $0x8] sm:$0xff] %v1860
    %1877 = vst [vmem:[#allocation7 + $0x10] sm:$0xff] %v1861
    %1878 = vst [vmem:[#allocation7 + $0x18] sm:$0xff] %v1862
    %1879 = vst [vmem:[#allocation7 + $0x20] sm:$0xff] %v1863
    %1880 = vst [vmem:[#allocation7 + $0x28] sm:$0xff] %v1864
    %1881 = vst [vmem:[#allocation7 + $0x30] sm:$0xff] %v1865
    %1882 = vst [vmem:[#allocation7 + $0x38] sm:$0xff] %v1866
    %1883 = vst [vmem:[#allocation7 + $0x40] sm:$0xff] %v1867
    %1884 = vst [vmem:[#allocation7 + $0x48] sm:$0xff] %v1868
    %1885 = vst [vmem:[#allocation7 + $0x50] sm:$0xff] %v1869
    %1886 = vst [vmem:[#allocation7 + $0x58] sm:$0xff] %v1870
    %1887 = vst [vmem:[#allocation7 + $0x60] sm:$0xff] %v1871
    %1888 = vst [vmem:[#allocation7 + $0x68] sm:$0xff] %v1872
    %1889 = vst [vmem:[#allocation7 + $0x70] sm:$0xff] %v1873
    %1890 = vst [vmem:[#allocation7 + $0x78] sm:$0xff] %v1874
    // Predicated region
    $region18: #{tpu_custom_call.1} parent=1 // pred_check
      _
    $region19: #{tpu_custom_call.1} parent=1 // pred_check_branch
      %1892 = sbr.rel (0) target = $region21
    $region20: #{tpu_custom_call.1} parent=1 // pred_region
      %s1894 = ssub.s32 2048, 2048
      %1895 = vsyncadd [#allocation4], %s1894
      %s1896 = sshll.u32 [#allocation7], 4
      %s1897 = int_to_ptr.vmem [resolvable:$true] %s1896
      %1902 = dma.vmem_to_hbm [thread:$0]  %s1897, 2048, %s2, [#allocation4], 256, 256, 16
    $region21: #{tpu_custom_call.1} parent=1 // pred_fallthru
      _
    // Predicated region
    $region22: #{tpu_custom_call.1} parent=1 // pred_check
      _
    $region23: #{tpu_custom_call.1} parent=1 // pred_check_branch
      %1904 = sbr.rel (0) target = $region25
    $region24: #{tpu_custom_call.1} parent=1 // pred_region
      %1905 = dma.done [#allocation4], 2048
    $region25: #{tpu_custom_call.1} parent=1 // pred_fallthru
      _
    %1906 = vsyncpa [#allocation3], 1
    %1907 = vsyncpa [#allocation6], 1
    %1908 = vsyncpa [#allocation4], 1

</llo_original>
